<compile_context>
chip_gen: v6e
topology: v6e:2x2x1
jax: 0.10.0
libtpu: 0.0.40
codegen_flags: <defaults>
</compile_context>

<pallas_src>
import functools

import jax
import jax.numpy as jnp
from jax.experimental import pallas as pl
from jax.experimental.pallas import tpu as pltpu


def _pick_block_batch(B, Ho, Wo):
    """Images per grid step: make M = Bblk*Ho*Wo reasonably tall, keep grid >= 2."""
    target = max(1, 1024 // (Ho * Wo))   # aim for ~1024 output rows per step
    best = 1
    for cand in range(1, B + 1):
        if B % cand != 0:
            continue
        if cand > target:
            break
        if (B // cand) >= 2 or (B == cand == 1):
            best = cand
    return best


def _make_basic_block_kernel(H, W, Cin, Cout, stride, has_proj, Bblk):
    Ho, Wo = H // stride, W // stride
    M = Bblk * Ho * Wo

    def kernel(*refs):
        if stride == 1:
            x_refs = refs[:1]
            n_x = 1

            def conv1_tap(kh, kw):  # contiguous shifted window of padded x
                return x_refs[0][:, kh:kh + Ho, kw:kw + Wo, :]

            def shortcut_in():      # un-padded x
                return x_refs[0][:, 1:H + 1, 1:W + 1, :]
        else:
            # 4 space-to-depth phases of the padded input (built in the wrapper):
            # phase p = 2*row_parity + col_parity, shape (Bblk, (H+2)//2, (W+2)//2, Cin).
            x_refs = refs[:4]
            n_x = 4

            def conv1_tap(kh, kw):
                ph = (kh % 2) * 2 + (kw % 2)
                oh, ow = kh // 2, kw // 2
                return x_refs[ph][:, oh:oh + Ho, ow:ow + Wo, :]

            def shortcut_in():      # x at even positions == phase (1,1) of padded x
                return x_refs[3][:, 0:Ho, 0:Wo, :]

        w1_ref = refs[n_x]
        w2_ref = refs[n_x + 1]
        if has_proj:
            ws_ref = refs[n_x + 2]
            o_ref = refs[n_x + 3]
            hpad_ref = refs[n_x + 4]
        else:
            ws_ref = None
            o_ref = refs[n_x + 2]
            hpad_ref = refs[n_x + 3]

        # ---- conv1 (3x3, stride=s, pad=1, no bias) + ReLU ----------------------------
        # fat-K: per kh concatenate the 3 kw taps on channels -> (M, 3*Cin) @ (3*Cin, Cout)
        acc1 = jnp.zeros((M, Cout), jnp.float32)
        for kh in range(3):
            fat = jnp.concatenate(
                [conv1_tap(kh, kw).reshape(M, Cin) for kw in range(3)], axis=-1)
            acc1 = acc1 + jnp.dot(fat, w1_ref[kh], preferred_element_type=jnp.float32)
        h = jnp.maximum(acc1, 0.0).astype(jnp.bfloat16)

        # ---- re-pad h (pad=1) in VMEM scratch; zero only the 1-px border each step ----
        zrow = jnp.zeros((Bblk, 1, Wo + 2, Cout), jnp.bfloat16)
        zcol = jnp.zeros((Bblk, Ho + 2, 1, Cout), jnp.bfloat16)
        hpad_ref[:, 0:1, :, :] = zrow
        hpad_ref[:, Ho + 1:Ho + 2, :, :] = zrow
        hpad_ref[:, :, 0:1, :] = zcol
        hpad_ref[:, :, Wo + 1:Wo + 2, :] = zcol
        hpad_ref[:, 1:Ho + 1, 1:Wo + 1, :] = h.reshape(Bblk, Ho, Wo, Cout)

        # ---- conv2 (3x3, stride=1, pad=1, no bias), same fat-K structure --------------
        acc2 = jnp.zeros((M, Cout), jnp.float32)
        for kh in range(3):
            fat = jnp.concatenate(
                [hpad_ref[:, kh:kh + Ho, kw:kw + Wo, :].reshape(M, Cout)
                 for kw in range(3)], axis=-1)
            acc2 = acc2 + jnp.dot(fat, w2_ref[kh], preferred_element_type=jnp.float32)

        # ---- shortcut (identity or 1x1 stride-s conv) + residual add + ReLU -----------
        sc = shortcut_in().reshape(M, Cin)
        if has_proj:
            res = jnp.dot(sc, ws_ref[...], preferred_element_type=jnp.float32)
        else:
            res = sc.astype(jnp.float32)  # identity path (Cin == Cout, stride == 1)

        out = jnp.maximum(acc2 + res, 0.0)
        o_ref[...] = out.reshape(Bblk, Ho, Wo, Cout).astype(o_ref.dtype)

    return kernel


@functools.partial(jax.jit, static_argnames=("stride",))
def basic_block_forward(x, conv1_w, conv2_w, shortcut_w=None, *, stride=1):
    """PyTorch-layout BasicBlock forward.

    x: (B, Cin, H, W) NCHW.  conv1_w: (Cout, Cin, 3, 3).  conv2_w: (Cout, Cout, 3, 3).
    shortcut_w: (Cout, Cin, 1, 1) when stride != 1 or Cin != Cout, else None.
    Returns NCHW (B, Cout, H//stride, W//stride) in float32.
    """
    B, Cin, H, W = x.shape
    Cout = conv1_w.shape[0]
    assert stride in (1, 2), "BasicBlock uses stride 1 or 2"
    assert H % stride == 0 and W % stride == 0
    Ho, Wo = H // stride, W // stride
    # Keep the in-kernel (Bblk, Ho, Wo, C) <-> (M, C) reshapes sublane-tile friendly.
    assert Wo % 8 == 0, "this kernel requires output width to be a multiple of 8"
    has_proj = (stride != 1) or (Cin != Cout)
    assert has_proj == (shortcut_w is not None)

    Bblk = _pick_block_batch(B, Ho, Wo)
    nblk = B // Bblk

    # Wrapper-side layout plumbing only: NCHW -> NHWC, bf16 cast, spatial zero pad.
    # TODO(synk): fold the pad (and NCHW<->NHWC) into the kernel to drop HBM passes.
    xh = jnp.transpose(x, (0, 2, 3, 1)).astype(jnp.bfloat16)
    xp = jnp.pad(xh, ((0, 0), (1, 1), (1, 1), (0, 0)))

    # (Cout, Cin, 3, 3) -> (3, 3*Cin, Cout): per-kh fat-K weight, K ordered (kw, cin).
    w1 = jnp.transpose(conv1_w, (2, 3, 1, 0)).reshape(3, 3 * Cin, Cout).astype(jnp.bfloat16)
    w2 = jnp.transpose(conv2_w, (2, 3, 1, 0)).reshape(3, 3 * Cout, Cout).astype(jnp.bfloat16)

    inputs, in_specs = [], []
    if stride == 1:
        inputs.append(xp)
        in_specs.append(pl.BlockSpec((Bblk, H + 2, W + 2, Cin), lambda b: (b, 0, 0, 0)))
    else:
        # Space-to-depth phase split: stride-2 conv taps become contiguous slices.
        Hp, Wp = (H + 2) // 2, (W + 2) // 2
        for pr in (0, 1):
            for pc in (0, 1):
                inputs.append(xp[:, pr::2, pc::2, :])
                in_specs.append(pl.BlockSpec((Bblk, Hp, Wp, Cin), lambda b: (b, 0, 0, 0)))

    inputs += [w1, w2]
    # Constant index_maps -> weights fetched once and VMEM-resident for the whole grid.
    in_specs += [pl.BlockSpec((3, 3 * Cin, Cout), lambda b: (0, 0, 0)),
                 pl.BlockSpec((3, 3 * Cout, Cout), lambda b: (0, 0, 0))]
    if has_proj:
        ws = jnp.transpose(shortcut_w.reshape(Cout, Cin), (1, 0)).astype(jnp.bfloat16)
        inputs.append(ws)
        in_specs.append(pl.BlockSpec((Cin, Cout), lambda b: (0, 0)))

    kernel = _make_basic_block_kernel(H, W, Cin, Cout, stride, has_proj, Bblk)

    out_nhwc = pl.pallas_call(
        kernel,
        out_shape=jax.ShapeDtypeStruct((B, Ho, Wo, Cout), jnp.float32),
        grid=(nblk,),
        in_specs=in_specs,
        out_specs=pl.BlockSpec((Bblk, Ho, Wo, Cout), lambda b: (b, 0, 0, 0)),
        scratch_shapes=[pltpu.VMEM((Bblk, Ho + 2, Wo + 2, Cout), jnp.bfloat16)],
        compiler_params=pltpu.CompilerParams(
            dimension_semantics=("parallel",),
            vmem_limit_bytes=64 * 1024 * 1024),
    )(*inputs)

    return jnp.transpose(out_nhwc, (0, 3, 1, 2))


def _reference_basic_block(x, conv1_w, conv2_w, shortcut_w, stride):
    """Pure-JAX f32 reference (same math as the PyTorch module)."""
    dn = ("NCHW", "OIHW", "NCHW")
    hp = jax.lax.Precision.HIGHEST
    out = jax.lax.conv_general_dilated(x, conv1_w, (stride, stride), ((1, 1), (1, 1)),
                                       dimension_numbers=dn, precision=hp)
    out = jnp.maximum(out, 0.0)
    out = jax.lax.conv_general_dilated(out, conv2_w, (1, 1), ((1, 1), (1, 1)),
                                       dimension_numbers=dn, precision=hp)
    if shortcut_w is not None:
        sc = jax.lax.conv_general_dilated(x, shortcut_w, (stride, stride), ((0, 0), (0, 0)),
                                          dimension_numbers=dn, precision=hp)
    else:
        sc = x
    return jnp.maximum(out + sc, 0.0)


if __name__ == "__main__":
    key = jax.random.PRNGKey(0)

    # --- Test 1: downsampling block (stride=2, 16 -> 32 channels, 1x1 conv shortcut) ---
    B, Cin, H, W, Cout, stride = 2, 16, 16, 16, 32, 2
    k1, k2, k3, k4, key = jax.random.split(key, 5)
    x = jax.random.normal(k1, (B, Cin, H, W), jnp.float32)
    conv1_w = jax.random.normal(k2, (Cout, Cin, 3, 3), jnp.float32) * 0.05
    conv2_w = jax.random.normal(k3, (Cout, Cout, 3, 3), jnp.float32) * 0.05
    sc_w = jax.random.normal(k4, (Cout, Cin, 1, 1), jnp.float32) * 0.05

    out = jax.block_until_ready(basic_block_forward(x, conv1_w, conv2_w, sc_w, stride=stride))
    ref = _reference_basic_block(x, conv1_w, conv2_w, sc_w, stride)
    assert out.shape == (B, Cout, H // stride, W // stride)
    assert jnp.allclose(out, ref, atol=2e-2, rtol=2e-2), \
        f"max err {jnp.max(jnp.abs(out - ref))}"

    # --- Test 2: identity block (stride=1, 32 -> 32 channels, identity shortcut) ---
    B2, C2, H2, W2 = 2, 32, 8, 8
    k1, k2, k3, key = jax.random.split(key, 4)
    x2 = jax.random.normal(k1, (B2, C2, H2, W2), jnp.float32)
    c1 = jax.random.normal(k2, (C2, C2, 3, 3), jnp.float32) * 0.05
    c2 = jax.random.normal(k3, (C2, C2, 3, 3), jnp.float32) * 0.05

    out2 = jax.block_until_ready(basic_block_forward(x2, c1, c2, None, stride=1))
    ref2 = _reference_basic_block(x2, c1, c2, None, 1)
    assert out2.shape == (B2, C2, H2, W2)
    assert jnp.allclose(out2, ref2, atol=2e-2, rtol=2e-2), \
        f"max err {jnp.max(jnp.abs(out2 - ref2))}"

    print("KERNEL_OK")
</pallas_src>

<mosaic_0001>
module attributes {stable_mosaic.version = 11 : i64} {
  func.func @kernel(%arg0: i32, %arg1: memref<1x9x9x16xbf16, #tpu.memory_space<vmem>>, %arg2: memref<1x9x9x16xbf16, #tpu.memory_space<vmem>>, %arg3: memref<1x9x9x16xbf16, #tpu.memory_space<vmem>>, %arg4: memref<1x9x9x16xbf16, #tpu.memory_space<vmem>>, %arg5: memref<3x48x32xbf16, #tpu.memory_space<vmem>>, %arg6: memref<3x96x32xbf16, #tpu.memory_space<vmem>>, %arg7: memref<16x32xbf16, #tpu.memory_space<vmem>>, %arg8: memref<1x8x8x32xf32, #tpu.memory_space<vmem>>, %arg9: memref<1x10x10x32xbf16, #tpu.memory_space<vmem>>) attributes {dimension_semantics = [#tpu.dimension_semantics<parallel>], iteration_bounds = array<i64: 2>, scalar_prefetch = 0 : i64, scratch_operands = 1 : i64, tpu.core_type = #tpu.core_type<tc>, window_params = [{transform_indices = @transform_0, window_bounds = array<i64: 1, 9, 9, 16>}, {transform_indices = @transform_1, window_bounds = array<i64: 1, 9, 9, 16>}, {transform_indices = @transform_2, window_bounds = array<i64: 1, 9, 9, 16>}, {transform_indices = @transform_3, window_bounds = array<i64: 1, 9, 9, 16>}, {pipeline_mode = #tpu.pipeline_mode<synchronous>, transform_indices = @transform_4, window_bounds = array<i64: 3, 48, 32>}, {pipeline_mode = #tpu.pipeline_mode<synchronous>, transform_indices = @transform_5, window_bounds = array<i64: 3, 96, 32>}, {pipeline_mode = #tpu.pipeline_mode<synchronous>, transform_indices = @transform_6, window_bounds = array<i64: 16, 32>}, {transform_indices = @transform_7, window_bounds = array<i64: 1, 8, 8, 32>}]} {
    %cst = arith.constant 0.000000e+00 : f32
    %0 = vector.broadcast %cst : f32 to vector<64x32xf32>
    %c0 = arith.constant 0 : index
    %c0_0 = arith.constant 0 : index
    %c0_1 = arith.constant 0 : index
    %c0_2 = arith.constant 0 : index
    %1 = vector.load %arg1[%c0, %c0_0, %c0_1, %c0_2] : memref<1x9x9x16xbf16, #tpu.memory_space<vmem>>, vector<1x8x8x16xbf16>
    %2 = vector.shape_cast %1 : vector<1x8x8x16xbf16> to vector<64x16xbf16>
    %c0_3 = arith.constant 0 : index
    %c0_4 = arith.constant 0 : index
    %c0_5 = arith.constant 0 : index
    %c0_6 = arith.constant 0 : index
    %3 = vector.load %arg2[%c0_3, %c0_4, %c0_5, %c0_6] : memref<1x9x9x16xbf16, #tpu.memory_space<vmem>>, vector<1x8x8x16xbf16>
    %4 = vector.shape_cast %3 : vector<1x8x8x16xbf16> to vector<64x16xbf16>
    %c0_7 = arith.constant 0 : index
    %c0_8 = arith.constant 0 : index
    %c1 = arith.constant 1 : index
    %c0_9 = arith.constant 0 : index
    %5 = vector.load %arg1[%c0_7, %c0_8, %c1, %c0_9] : memref<1x9x9x16xbf16, #tpu.memory_space<vmem>>, vector<1x8x8x16xbf16>
    %6 = vector.shape_cast %5 : vector<1x8x8x16xbf16> to vector<64x16xbf16>
    %7 = tpu.concatenate %2, %4, %6 in 1 : vector<64x16xbf16>, vector<64x16xbf16>, vector<64x16xbf16> -> vector<64x48xbf16>
    %c0_10 = arith.constant 0 : index
    %c0_11 = arith.constant 0 : index
    %c0_12 = arith.constant 0 : index
    %8 = vector.load %arg5[%c0_10, %c0_11, %c0_12] : memref<3x48x32xbf16, #tpu.memory_space<vmem>>, vector<1x48x32xbf16>
    %9 = vector.shape_cast %8 : vector<1x48x32xbf16> to vector<48x32xbf16>
    %cst_13 = arith.constant dense<0.000000e+00> : vector<64x32xf32>
    %10 = tpu.matmul %7, %9, %cst_13 {dimension_numbers = #tpu.dot_dimension_numbers<[1], [0], [0], [1], [0, 0, 1, 1], [], []>} : vector<64x48xbf16>, vector<48x32xbf16>, vector<64x32xf32> -> vector<64x32xf32>
    %11 = arith.addf %0, %10 : vector<64x32xf32>
    %c0_14 = arith.constant 0 : index
    %c0_15 = arith.constant 0 : index
    %c0_16 = arith.constant 0 : index
    %c0_17 = arith.constant 0 : index
    %12 = vector.load %arg3[%c0_14, %c0_15, %c0_16, %c0_17] : memref<1x9x9x16xbf16, #tpu.memory_space<vmem>>, vector<1x8x8x16xbf16>
    %13 = vector.shape_cast %12 : vector<1x8x8x16xbf16> to vector<64x16xbf16>
    %c0_18 = arith.constant 0 : index
    %c0_19 = arith.constant 0 : index
    %c0_20 = arith.constant 0 : index
    %c0_21 = arith.constant 0 : index
    %14 = vector.load %arg4[%c0_18, %c0_19, %c0_20, %c0_21] : memref<1x9x9x16xbf16, #tpu.memory_space<vmem>>, vector<1x8x8x16xbf16>
    %15 = vector.shape_cast %14 : vector<1x8x8x16xbf16> to vector<64x16xbf16>
    %c0_22 = arith.constant 0 : index
    %c0_23 = arith.constant 0 : index
    %c1_24 = arith.constant 1 : index
    %c0_25 = arith.constant 0 : index
    %16 = vector.load %arg3[%c0_22, %c0_23, %c1_24, %c0_25] : memref<1x9x9x16xbf16, #tpu.memory_space<vmem>>, vector<1x8x8x16xbf16>
    %17 = vector.shape_cast %16 : vector<1x8x8x16xbf16> to vector<64x16xbf16>
    %18 = tpu.concatenate %13, %15, %17 in 1 : vector<64x16xbf16>, vector<64x16xbf16>, vector<64x16xbf16> -> vector<64x48xbf16>
    %c1_26 = arith.constant 1 : index
    %c0_27 = arith.constant 0 : index
    %c0_28 = arith.constant 0 : index
    %19 = vector.load %arg5[%c1_26, %c0_27, %c0_28] : memref<3x48x32xbf16, #tpu.memory_space<vmem>>, vector<1x48x32xbf16>
    %20 = vector.shape_cast %19 : vector<1x48x32xbf16> to vector<48x32xbf16>
    %cst_29 = arith.constant dense<0.000000e+00> : vector<64x32xf32>
    %21 = tpu.matmul %18, %20, %cst_29 {dimension_numbers = #tpu.dot_dimension_numbers<[1], [0], [0], [1], [0, 0, 1, 1], [], []>} : vector<64x48xbf16>, vector<48x32xbf16>, vector<64x32xf32> -> vector<64x32xf32>
    %22 = arith.addf %11, %21 : vector<64x32xf32>
    %c0_30 = arith.constant 0 : index
    %c1_31 = arith.constant 1 : index
    %c0_32 = arith.constant 0 : index
    %c0_33 = arith.constant 0 : index
    %23 = vector.load %arg1[%c0_30, %c1_31, %c0_32, %c0_33] : memref<1x9x9x16xbf16, #tpu.memory_space<vmem>>, vector<1x8x8x16xbf16>
    %24 = vector.shape_cast %23 : vector<1x8x8x16xbf16> to vector<64x16xbf16>
    %c0_34 = arith.constant 0 : index
    %c1_35 = arith.constant 1 : index
    %c0_36 = arith.constant 0 : index
    %c0_37 = arith.constant 0 : index
    %25 = vector.load %arg2[%c0_34, %c1_35, %c0_36, %c0_37] : memref<1x9x9x16xbf16, #tpu.memory_space<vmem>>, vector<1x8x8x16xbf16>
    %26 = vector.shape_cast %25 : vector<1x8x8x16xbf16> to vector<64x16xbf16>
    %c0_38 = arith.constant 0 : index
    %c1_39 = arith.constant 1 : index
    %c1_40 = arith.constant 1 : index
    %c0_41 = arith.constant 0 : index
    %27 = vector.load %arg1[%c0_38, %c1_39, %c1_40, %c0_41] : memref<1x9x9x16xbf16, #tpu.memory_space<vmem>>, vector<1x8x8x16xbf16>
    %28 = vector.shape_cast %27 : vector<1x8x8x16xbf16> to vector<64x16xbf16>
    %29 = tpu.concatenate %24, %26, %28 in 1 : vector<64x16xbf16>, vector<64x16xbf16>, vector<64x16xbf16> -> vector<64x48xbf16>
    %c2 = arith.constant 2 : index
    %c0_42 = arith.constant 0 : index
    %c0_43 = arith.constant 0 : index
    %30 = vector.load %arg5[%c2, %c0_42, %c0_43] : memref<3x48x32xbf16, #tpu.memory_space<vmem>>, vector<1x48x32xbf16>
    %31 = vector.shape_cast %30 : vector<1x48x32xbf16> to vector<48x32xbf16>
    %cst_44 = arith.constant dense<0.000000e+00> : vector<64x32xf32>
    %32 = tpu.matmul %29, %31, %cst_44 {dimension_numbers = #tpu.dot_dimension_numbers<[1], [0], [0], [1], [0, 0, 1, 1], [], []>} : vector<64x48xbf16>, vector<48x32xbf16>, vector<64x32xf32> -> vector<64x32xf32>
    %33 = arith.addf %22, %32 : vector<64x32xf32>
    %cst_45 = arith.constant 0.000000e+00 : f32
    %34 = vector.broadcast %cst_45 : f32 to vector<64x32xf32>
    %35 = arith.maximumf %33, %34 : vector<64x32xf32>
    %36 = arith.truncf %35 : vector<64x32xf32> to vector<64x32xbf16>
    %cst_46 = arith.constant 0.000000e+00 : bf16
    %37 = vector.broadcast %cst_46 : bf16 to vector<1x1x10x32xbf16>
    %cst_47 = arith.constant 0.000000e+00 : bf16
    %38 = vector.broadcast %cst_47 : bf16 to vector<1x10x1x32xbf16>
    %c0_48 = arith.constant 0 : index
    %c0_49 = arith.constant 0 : index
    %c0_50 = arith.constant 0 : index
    %c0_51 = arith.constant 0 : index
    %39 = vector.load %arg9[%c0_48, %c0_49, %c0_50, %c0_51] : memref<1x10x10x32xbf16, #tpu.memory_space<vmem>>, vector<1x1x10x32xbf16>
    tpu.vector_store %arg9[%c0_48, %c0_49, %c0_50, %c0_51], %37 {strides = array<i32>} : memref<1x10x10x32xbf16, #tpu.memory_space<vmem>>, vector<1x1x10x32xbf16>,
    %c0_52 = arith.constant 0 : index
    %c9 = arith.constant 9 : index
    %c0_53 = arith.constant 0 : index
    %c0_54 = arith.constant 0 : index
    %40 = vector.load %arg9[%c0_52, %c9, %c0_53, %c0_54] : memref<1x10x10x32xbf16, #tpu.memory_space<vmem>>, vector<1x1x10x32xbf16>
    tpu.vector_store %arg9[%c0_52, %c9, %c0_53, %c0_54], %37 {strides = array<i32>} : memref<1x10x10x32xbf16, #tpu.memory_space<vmem>>, vector<1x1x10x32xbf16>,
    %c0_55 = arith.constant 0 : index
    %c0_56 = arith.constant 0 : index
    %c0_57 = arith.constant 0 : index
    %c0_58 = arith.constant 0 : index
    %41 = vector.load %arg9[%c0_55, %c0_56, %c0_57, %c0_58] : memref<1x10x10x32xbf16, #tpu.memory_space<vmem>>, vector<1x10x1x32xbf16>
    tpu.vector_store %arg9[%c0_55, %c0_56, %c0_57, %c0_58], %38 {strides = array<i32>} : memref<1x10x10x32xbf16, #tpu.memory_space<vmem>>, vector<1x10x1x32xbf16>,
    %c0_59 = arith.constant 0 : index
    %c0_60 = arith.constant 0 : index
    %c9_61 = arith.constant 9 : index
    %c0_62 = arith.constant 0 : index
    %42 = vector.load %arg9[%c0_59, %c0_60, %c9_61, %c0_62] : memref<1x10x10x32xbf16, #tpu.memory_space<vmem>>, vector<1x10x1x32xbf16>
    tpu.vector_store %arg9[%c0_59, %c0_60, %c9_61, %c0_62], %38 {strides = array<i32>} : memref<1x10x10x32xbf16, #tpu.memory_space<vmem>>, vector<1x10x1x32xbf16>,
    %43 = vector.shape_cast %36 : vector<64x32xbf16> to vector<1x8x8x32xbf16>
    %c0_63 = arith.constant 0 : index
    %c1_64 = arith.constant 1 : index
    %c1_65 = arith.constant 1 : index
    %c0_66 = arith.constant 0 : index
    %44 = vector.load %arg9[%c0_63, %c1_64, %c1_65, %c0_66] : memref<1x10x10x32xbf16, #tpu.memory_space<vmem>>, vector<1x8x8x32xbf16>
    tpu.vector_store %arg9[%c0_63, %c1_64, %c1_65, %c0_66], %43 {strides = array<i32>} : memref<1x10x10x32xbf16, #tpu.memory_space<vmem>>, vector<1x8x8x32xbf16>,
    %cst_67 = arith.constant 0.000000e+00 : f32
    %45 = vector.broadcast %cst_67 : f32 to vector<64x32xf32>
    %c0_68 = arith.constant 0 : index
    %c0_69 = arith.constant 0 : index
    %c0_70 = arith.constant 0 : index
    %c0_71 = arith.constant 0 : index
    %46 = vector.load %arg9[%c0_68, %c0_69, %c0_70, %c0_71] : memref<1x10x10x32xbf16, #tpu.memory_space<vmem>>, vector<1x8x8x32xbf16>
    %47 = vector.shape_cast %46 : vector<1x8x8x32xbf16> to vector<64x32xbf16>
    %c0_72 = arith.constant 0 : index
    %c0_73 = arith.constant 0 : index
    %c1_74 = arith.constant 1 : index
    %c0_75 = arith.constant 0 : index
    %48 = vector.load %arg9[%c0_72, %c0_73, %c1_74, %c0_75] : memref<1x10x10x32xbf16, #tpu.memory_space<vmem>>, vector<1x8x8x32xbf16>
    %49 = vector.shape_cast %48 : vector<1x8x8x32xbf16> to vector<64x32xbf16>
    %c0_76 = arith.constant 0 : index
    %c0_77 = arith.constant 0 : index
    %c2_78 = arith.constant 2 : index
    %c0_79 = arith.constant 0 : index
    %50 = vector.load %arg9[%c0_76, %c0_77, %c2_78, %c0_79] : memref<1x10x10x32xbf16, #tpu.memory_space<vmem>>, vector<1x8x8x32xbf16>
    %51 = vector.shape_cast %50 : vector<1x8x8x32xbf16> to vector<64x32xbf16>
    %52 = tpu.concatenate %47, %49, %51 in 1 : vector<64x32xbf16>, vector<64x32xbf16>, vector<64x32xbf16> -> vector<64x96xbf16>
    %c0_80 = arith.constant 0 : index
    %c0_81 = arith.constant 0 : index
    %c0_82 = arith.constant 0 : index
    %53 = vector.load %arg6[%c0_80, %c0_81, %c0_82] : memref<3x96x32xbf16, #tpu.memory_space<vmem>>, vector<1x96x32xbf16>
    %54 = vector.shape_cast %53 : vector<1x96x32xbf16> to vector<96x32xbf16>
    %cst_83 = arith.constant dense<0.000000e+00> : vector<64x32xf32>
    %55 = tpu.matmul %52, %54, %cst_83 {dimension_numbers = #tpu.dot_dimension_numbers<[1], [0], [0], [1], [0, 0, 1, 1], [], []>} : vector<64x96xbf16>, vector<96x32xbf16>, vector<64x32xf32> -> vector<64x32xf32>
    %56 = arith.addf %45, %55 : vector<64x32xf32>
    %c0_84 = arith.constant 0 : index
    %c1_85 = arith.constant 1 : index
    %c0_86 = arith.constant 0 : index
    %c0_87 = arith.constant 0 : index
    %57 = vector.load %arg9[%c0_84, %c1_85, %c0_86, %c0_87] : memref<1x10x10x32xbf16, #tpu.memory_space<vmem>>, vector<1x8x8x32xbf16>
    %58 = vector.shape_cast %57 : vector<1x8x8x32xbf16> to vector<64x32xbf16>
    %c0_88 = arith.constant 0 : index
    %c1_89 = arith.constant 1 : index
    %c1_90 = arith.constant 1 : index
    %c0_91 = arith.constant 0 : index
    %59 = vector.load %arg9[%c0_88, %c1_89, %c1_90, %c0_91] : memref<1x10x10x32xbf16, #tpu.memory_space<vmem>>, vector<1x8x8x32xbf16>
    %60 = vector.shape_cast %59 : vector<1x8x8x32xbf16> to vector<64x32xbf16>
    %c0_92 = arith.constant 0 : index
    %c1_93 = arith.constant 1 : index
    %c2_94 = arith.constant 2 : index
    %c0_95 = arith.constant 0 : index
    %61 = vector.load %arg9[%c0_92, %c1_93, %c2_94, %c0_95] : memref<1x10x10x32xbf16, #tpu.memory_space<vmem>>, vector<1x8x8x32xbf16>
    %62 = vector.shape_cast %61 : vector<1x8x8x32xbf16> to vector<64x32xbf16>
    %63 = tpu.concatenate %58, %60, %62 in 1 : vector<64x32xbf16>, vector<64x32xbf16>, vector<64x32xbf16> -> vector<64x96xbf16>
    %c1_96 = arith.constant 1 : index
    %c0_97 = arith.constant 0 : index
    %c0_98 = arith.constant 0 : index
    %64 = vector.load %arg6[%c1_96, %c0_97, %c0_98] : memref<3x96x32xbf16, #tpu.memory_space<vmem>>, vector<1x96x32xbf16>
    %65 = vector.shape_cast %64 : vector<1x96x32xbf16> to vector<96x32xbf16>
    %cst_99 = arith.constant dense<0.000000e+00> : vector<64x32xf32>
    %66 = tpu.matmul %63, %65, %cst_99 {dimension_numbers = #tpu.dot_dimension_numbers<[1], [0], [0], [1], [0, 0, 1, 1], [], []>} : vector<64x96xbf16>, vector<96x32xbf16>, vector<64x32xf32> -> vector<64x32xf32>
    %67 = arith.addf %56, %66 : vector<64x32xf32>
    %c0_100 = arith.constant 0 : index
    %c2_101 = arith.constant 2 : index
    %c0_102 = arith.constant 0 : index
    %c0_103 = arith.constant 0 : index
    %68 = vector.load %arg9[%c0_100, %c2_101, %c0_102, %c0_103] : memref<1x10x10x32xbf16, #tpu.memory_space<vmem>>, vector<1x8x8x32xbf16>
    %69 = vector.shape_cast %68 : vector<1x8x8x32xbf16> to vector<64x32xbf16>
    %c0_104 = arith.constant 0 : index
    %c2_105 = arith.constant 2 : index
    %c1_106 = arith.constant 1 : index
    %c0_107 = arith.constant 0 : index
    %70 = vector.load %arg9[%c0_104, %c2_105, %c1_106, %c0_107] : memref<1x10x10x32xbf16, #tpu.memory_space<vmem>>, vector<1x8x8x32xbf16>
    %71 = vector.shape_cast %70 : vector<1x8x8x32xbf16> to vector<64x32xbf16>
    %c0_108 = arith.constant 0 : index
    %c2_109 = arith.constant 2 : index
    %c2_110 = arith.constant 2 : index
    %c0_111 = arith.constant 0 : index
    %72 = vector.load %arg9[%c0_108, %c2_109, %c2_110, %c0_111] : memref<1x10x10x32xbf16, #tpu.memory_space<vmem>>, vector<1x8x8x32xbf16>
    %73 = vector.shape_cast %72 : vector<1x8x8x32xbf16> to vector<64x32xbf16>
    %74 = tpu.concatenate %69, %71, %73 in 1 : vector<64x32xbf16>, vector<64x32xbf16>, vector<64x32xbf16> -> vector<64x96xbf16>
    %c2_112 = arith.constant 2 : index
    %c0_113 = arith.constant 0 : index
    %c0_114 = arith.constant 0 : index
    %75 = vector.load %arg6[%c2_112, %c0_113, %c0_114] : memref<3x96x32xbf16, #tpu.memory_space<vmem>>, vector<1x96x32xbf16>
    %76 = vector.shape_cast %75 : vector<1x96x32xbf16> to vector<96x32xbf16>
    %cst_115 = arith.constant dense<0.000000e+00> : vector<64x32xf32>
    %77 = tpu.matmul %74, %76, %cst_115 {dimension_numbers = #tpu.dot_dimension_numbers<[1], [0], [0], [1], [0, 0, 1, 1], [], []>} : vector<64x96xbf16>, vector<96x32xbf16>, vector<64x32xf32> -> vector<64x32xf32>
    %78 = arith.addf %67, %77 : vector<64x32xf32>
    %c0_116 = arith.constant 0 : index
    %c0_117 = arith.constant 0 : index
    %c0_118 = arith.constant 0 : index
    %c0_119 = arith.constant 0 : index
    %79 = vector.load %arg4[%c0_116, %c0_117, %c0_118, %c0_119] : memref<1x9x9x16xbf16, #tpu.memory_space<vmem>>, vector<1x8x8x16xbf16>
    %80 = vector.shape_cast %79 : vector<1x8x8x16xbf16> to vector<64x16xbf16>
    %c0_120 = arith.constant 0 : index
    %c0_121 = arith.constant 0 : index
    %81 = vector.load %arg7[%c0_120, %c0_121] : memref<16x32xbf16, #tpu.memory_space<vmem>>, vector<16x32xbf16>
    %cst_122 = arith.constant dense<0.000000e+00> : vector<64x32xf32>
    %82 = tpu.matmul %80, %81, %cst_122 {dimension_numbers = #tpu.dot_dimension_numbers<[1], [0], [0], [1], [0, 0, 1, 1], [], []>} : vector<64x16xbf16>, vector<16x32xbf16>, vector<64x32xf32> -> vector<64x32xf32>
    %83 = arith.addf %78, %82 : vector<64x32xf32>
    %cst_123 = arith.constant 0.000000e+00 : f32
    %84 = vector.broadcast %cst_123 : f32 to vector<64x32xf32>
    %85 = arith.maximumf %83, %84 : vector<64x32xf32>
    %86 = vector.shape_cast %85 : vector<64x32xf32> to vector<1x8x8x32xf32>
    %c0_124 = arith.constant 0 : index
    %c0_125 = arith.constant 0 : index
    %c0_126 = arith.constant 0 : index
    %c0_127 = arith.constant 0 : index
    %87 = vector.load %arg8[%c0_124, %c0_125, %c0_126, %c0_127] : memref<1x8x8x32xf32, #tpu.memory_space<vmem>>, vector<1x8x8x32xf32>
    tpu.vector_store %arg8[%c0_124, %c0_125, %c0_126, %c0_127], %86 {strides = array<i32>} : memref<1x8x8x32xf32, #tpu.memory_space<vmem>>, vector<1x8x8x32xf32>,
    return
  }
  func.func @transform_0(%arg0: i32) -> (i32, i32, i32, i32) {
    %c0_i32 = arith.constant 0 : i32
    %c0_i32_0 = arith.constant 0 : i32
    %c0_i32_1 = arith.constant 0 : i32
    %c0_i32_2 = arith.constant 0 : i32
    return %arg0, %c0_i32, %c0_i32_0, %c0_i32_1 : i32, i32, i32, i32
  }
  func.func @transform_1(%arg0: i32) -> (i32, i32, i32, i32) {
    %c0_i32 = arith.constant 0 : i32
    %c0_i32_0 = arith.constant 0 : i32
    %c0_i32_1 = arith.constant 0 : i32
    %c0_i32_2 = arith.constant 0 : i32
    return %arg0, %c0_i32, %c0_i32_0, %c0_i32_1 : i32, i32, i32, i32
  }
  func.func @transform_2(%arg0: i32) -> (i32, i32, i32, i32) {
    %c0_i32 = arith.constant 0 : i32
    %c0_i32_0 = arith.constant 0 : i32
    %c0_i32_1 = arith.constant 0 : i32
    %c0_i32_2 = arith.constant 0 : i32
    return %arg0, %c0_i32, %c0_i32_0, %c0_i32_1 : i32, i32, i32, i32
  }
  func.func @transform_3(%arg0: i32) -> (i32, i32, i32, i32) {
    %c0_i32 = arith.constant 0 : i32
    %c0_i32_0 = arith.constant 0 : i32
    %c0_i32_1 = arith.constant 0 : i32
    %c0_i32_2 = arith.constant 0 : i32
    return %arg0, %c0_i32, %c0_i32_0, %c0_i32_1 : i32, i32, i32, i32
  }
  func.func @transform_4(%arg0: i32) -> (i32, i32, i32) {
    %c0_i32 = arith.constant 0 : i32
    %c0_i32_0 = arith.constant 0 : i32
    %c0_i32_1 = arith.constant 0 : i32
    %c0_i32_2 = arith.constant 0 : i32
    return %c0_i32, %c0_i32_0, %c0_i32_1 : i32, i32, i32
  }
  func.func @transform_5(%arg0: i32) -> (i32, i32, i32) {
    %c0_i32 = arith.constant 0 : i32
    %c0_i32_0 = arith.constant 0 : i32
    %c0_i32_1 = arith.constant 0 : i32
    %c0_i32_2 = arith.constant 0 : i32
    return %c0_i32, %c0_i32_0, %c0_i32_1 : i32, i32, i32
  }
  func.func @transform_6(%arg0: i32) -> (i32, i32) {
    %c0_i32 = arith.constant 0 : i32
    %c0_i32_0 = arith.constant 0 : i32
    %c0_i32_1 = arith.constant 0 : i32
    return %c0_i32, %c0_i32_0 : i32, i32
  }
  func.func @transform_7(%arg0: i32) -> (i32, i32, i32, i32) {
    %c0_i32 = arith.constant 0 : i32
    %c0_i32_0 = arith.constant 0 : i32
    %c0_i32_1 = arith.constant 0 : i32
    %c0_i32_2 = arith.constant 0 : i32
    return %arg0, %c0_i32, %c0_i32_0, %c0_i32_1 : i32, i32, i32, i32
  }
}

</mosaic_0001>

<llo_original>
// kernel: basic_block_forward.1
$region0: #{basic_block_forward.1}
  #allocation0 [shape = 'u32[]', space=smem, size = 0x4, offset = 0x4, fixed_abs, tag = 'smem constant byte address 0x4 - core index']
  #allocation1 [shape = 'u32[144,128]{1,0:T(1,128)}', space=vmem, size = 0x12000, scoped, tag = 'internal scratch']
  #allocation2 [shape = 'bf16[1,10,10,32]{3,2,1,0:T(8,128)(2,1)}', space=vmem, size = 0xa000, scoped, tag = 'scratch operand']
  %s0 = inlined_call_operand.vmem [shape: bf16[2,9,9,16], index: 0, kind: input, shape index: {}]
  %s1 = inlined_call_operand.vmem [shape: bf16[2,9,9,16], index: 1, kind: input, shape index: {}]
  %s2 = inlined_call_operand.vmem [shape: bf16[2,9,9,16], index: 2, kind: input, shape index: {}]
  %s3 = inlined_call_operand.vmem [shape: bf16[2,9,9,16], index: 3, kind: input, shape index: {}]
  %s4 = inlined_call_operand.vmem [shape: bf16[3,48,32], index: 4, kind: input, shape index: {}]
  %s5 = inlined_call_operand.vmem [shape: bf16[3,96,32], index: 5, kind: input, shape index: {}]
  %s6 = inlined_call_operand.vmem [shape: bf16[16,32], index: 6, kind: input, shape index: {}]
  %s7 = inlined_call_operand.hbm [shape: f32[2,8,8,32], index: 7, kind: output, shape index: {}]
  %s8 = sld [smem:[#allocation0]]
  $region61: #{basic_block_forward.1} parent=0
    _
  %s10 = ssub.s32 1, %s8
  %s11 = scalar_select 0, %s10, %s8
  $region1: #{basic_block_forward.1} parent=0
    #allocation3 [shape = 'u8[65536]{0}', space=vmem, size = 0x10000, scoped, tag = 'output window, operand 0']
    #allocation4 [shape = 's32[2]{0}', space=sflag, size = 0x8, scoped, tag = 'scoped memory for basic_block_forward.1']
    %12 = vsyncpa [#allocation4], 0
    %s13 = scalar_lea.sflag [#allocation4], 1
    %14 = vsyncpa %s13, 0
    loop: start=0, step=1, limit=4
    $region2: #{basic_block_forward.1} parent=1 // loop_pre_header
      _
    $region3: #{basic_block_forward.1} parent=1 // loop_header
      %s16 = sphi 0, %s20
      %p17 = scmp.ge.s32.totalorder %s16, 4
      %s26 = sphi 0, %s28
      %s29 = sphi 0, %s26
      %s30 = sphi 0, %s29
      %s46 = sphi 0, %s30
      %s52 = sphi 0, %s54
      %s55 = sphi 0, %s52
      %s56 = sphi 0, %s55
      %s72 = sphi 0, %s56
      %s78 = sphi 0, %s80
      %s81 = sphi 0, %s78
      %s82 = sphi 0, %s81
      %s98 = sphi 0, %s82
      %s104 = sphi 0, %s106
      %s107 = sphi 0, %s104
      %s108 = sphi 0, %s107
      %s124 = sphi 0, %s108
      %s128 = sphi 0, %s128
      %s130 = sphi 0, %s128
      %s131 = sphi 0, %s130
      %s145 = sphi 0, %s131
      %s149 = sphi 0, %s149
      %s151 = sphi 0, %s149
      %s152 = sphi 0, %s151
      %s166 = sphi 0, %s152
      %s170 = sphi 0, %s170
      %s172 = sphi 0, %s170
      %s173 = sphi 0, %s172
      %s187 = sphi 0, %s173
      %s193 = sphi 0, %s195
      %s196 = sphi 0, %s193
      %s197 = sphi 0, %s196
      %s213 = sphi 0, %s197
    $region4: #{basic_block_forward.1} parent=1 // loop_header_branch
      %19 = sbr.rel (%p17) target = $region8
    $region5: #{basic_block_forward.1} parent=1 // loop_body
      %s21 = ssub.s32 %s16, 1
      %s22 = ssub.s32 %s16, 2
      %s23 = sadd.s32 %s16, 1
      %s24 = ssub.s32 %s16, %s23
      %p25 = scmp.eq.s32.totalorder %s24, 0
      %s27 = sadd.s32 %s26, 1
      %s28 = scalar_select %p25, %s26, %s27
      %p31 = pneg %p25
      %p32 = scmp.eq.s32.totalorder %s16, 1
      %p33 = por %p31, %p32
      %p34 = scmp.ne.s32.totalorder %s26, %s29
      %p35 = scmp.eq.s32.totalorder %s16, 0
      %p36 = por %p34, %p35
      %p37 = scmp.ne.s32.totalorder %s26, %s29
      %p38 = scmp.eq.s32.totalorder %s21, 1
      %p39 = por %p37, %p38
      %p40 = scmp.ne.s32.totalorder %s29, %s30
      %p41 = scmp.eq.s32.totalorder %s21, 0
      %p42 = por %p40, %p41
      %p43 = scmp.ne.s32.totalorder %s29, %s30
      %p44 = scmp.eq.s32.totalorder %s22, 1
      %p45 = por %p43, %p44
      %p47 = scmp.ne.s32.totalorder %s30, %s46
      %p48 = scmp.eq.s32.totalorder %s22, 0
      %p49 = por %p47, %p48
      %s50 = ssub.s32 %s16, %s23
      %p51 = scmp.eq.s32.totalorder %s50, 0
      %s53 = sadd.s32 %s52, 1
      %s54 = scalar_select %p51, %s52, %s53
      %p57 = pneg %p51
      %p58 = scmp.eq.s32.totalorder %s16, 1
      %p59 = por %p57, %p58
      %p60 = scmp.ne.s32.totalorder %s52, %s55
      %p61 = scmp.eq.s32.totalorder %s16, 0
      %p62 = por %p60, %p61
      %p63 = scmp.ne.s32.totalorder %s52, %s55
      %p64 = scmp.eq.s32.totalorder %s21, 1
      %p65 = por %p63, %p64
      %p66 = scmp.ne.s32.totalorder %s55, %s56
      %p67 = scmp.eq.s32.totalorder %s21, 0
      %p68 = por %p66, %p67
      %p69 = scmp.ne.s32.totalorder %s55, %s56
      %p70 = scmp.eq.s32.totalorder %s22, 1
      %p71 = por %p69, %p70
      %p73 = scmp.ne.s32.totalorder %s56, %s72
      %p74 = scmp.eq.s32.totalorder %s22, 0
      %p75 = por %p73, %p74
      %s76 = ssub.s32 %s16, %s23
      %p77 = scmp.eq.s32.totalorder %s76, 0
      %s79 = sadd.s32 %s78, 1
      %s80 = scalar_select %p77, %s78, %s79
      %p83 = pneg %p77
      %p84 = scmp.eq.s32.totalorder %s16, 1
      %p85 = por %p83, %p84
      %p86 = scmp.ne.s32.totalorder %s78, %s81
      %p87 = scmp.eq.s32.totalorder %s16, 0
      %p88 = por %p86, %p87
      %p89 = scmp.ne.s32.totalorder %s78, %s81
      %p90 = scmp.eq.s32.totalorder %s21, 1
      %p91 = por %p89, %p90
      %p92 = scmp.ne.s32.totalorder %s81, %s82
      %p93 = scmp.eq.s32.totalorder %s21, 0
      %p94 = por %p92, %p93
      %p95 = scmp.ne.s32.totalorder %s81, %s82
      %p96 = scmp.eq.s32.totalorder %s22, 1
      %p97 = por %p95, %p96
      %p99 = scmp.ne.s32.totalorder %s82, %s98
      %p100 = scmp.eq.s32.totalorder %s22, 0
      %p101 = por %p99, %p100
      %s102 = ssub.s32 %s16, %s23
      %p103 = scmp.eq.s32.totalorder %s102, 0
      %s105 = sadd.s32 %s104, 1
      %s106 = scalar_select %p103, %s104, %s105
      %p109 = pneg %p103
      %p110 = scmp.eq.s32.totalorder %s16, 1
      %p111 = por %p109, %p110
      %p112 = scmp.ne.s32.totalorder %s104, %s107
      %p113 = scmp.eq.s32.totalorder %s16, 0
      %p114 = por %p112, %p113
      %p115 = scmp.ne.s32.totalorder %s104, %s107
      %p116 = scmp.eq.s32.totalorder %s21, 1
      %p117 = por %p115, %p116
      %p118 = scmp.ne.s32.totalorder %s107, %s108
      %p119 = scmp.eq.s32.totalorder %s21, 0
      %p120 = por %p118, %p119
      %p121 = scmp.ne.s32.totalorder %s107, %s108
      %p122 = scmp.eq.s32.totalorder %s22, 1
      %p123 = por %p121, %p122
      %p125 = scmp.ne.s32.totalorder %s108, %s124
      %p126 = scmp.eq.s32.totalorder %s22, 0
      %p127 = por %p125, %p126
      %s129 = sadd.s32 %s128, 1
      %p132 = scmp.eq.s32.totalorder %s16, 1
      %p133 = scmp.ne.s32.totalorder %s128, %s130
      %p134 = scmp.eq.s32.totalorder %s16, 0
      %p135 = por %p133, %p134
      %p136 = scmp.ne.s32.totalorder %s128, %s130
      %p137 = scmp.eq.s32.totalorder %s21, 1
      %p138 = por %p136, %p137
      %p139 = scmp.ne.s32.totalorder %s130, %s131
      %p140 = scmp.eq.s32.totalorder %s21, 0
      %p141 = por %p139, %p140
      %p142 = scmp.ne.s32.totalorder %s130, %s131
      %p143 = scmp.eq.s32.totalorder %s22, 1
      %p144 = por %p142, %p143
      %p146 = scmp.ne.s32.totalorder %s131, %s145
      %p147 = scmp.eq.s32.totalorder %s22, 0
      %p148 = por %p146, %p147
      %s150 = sadd.s32 %s149, 1
      %p153 = scmp.eq.s32.totalorder %s16, 1
      %p154 = scmp.ne.s32.totalorder %s149, %s151
      %p155 = scmp.eq.s32.totalorder %s16, 0
      %p156 = por %p154, %p155
      %p157 = scmp.ne.s32.totalorder %s149, %s151
      %p158 = scmp.eq.s32.totalorder %s21, 1
      %p159 = por %p157, %p158
      %p160 = scmp.ne.s32.totalorder %s151, %s152
      %p161 = scmp.eq.s32.totalorder %s21, 0
      %p162 = por %p160, %p161
      %p163 = scmp.ne.s32.totalorder %s151, %s152
      %p164 = scmp.eq.s32.totalorder %s22, 1
      %p165 = por %p163, %p164
      %p167 = scmp.ne.s32.totalorder %s152, %s166
      %p168 = scmp.eq.s32.totalorder %s22, 0
      %p169 = por %p167, %p168
      %s171 = sadd.s32 %s170, 1
      %p174 = scmp.eq.s32.totalorder %s16, 1
      %p175 = scmp.ne.s32.totalorder %s170, %s172
      %p176 = scmp.eq.s32.totalorder %s16, 0
      %p177 = por %p175, %p176
      %p178 = scmp.ne.s32.totalorder %s170, %s172
      %p179 = scmp.eq.s32.totalorder %s21, 1
      %p180 = por %p178, %p179
      %p181 = scmp.ne.s32.totalorder %s172, %s173
      %p182 = scmp.eq.s32.totalorder %s21, 0
      %p183 = por %p181, %p182
      %p184 = scmp.ne.s32.totalorder %s172, %s173
      %p185 = scmp.eq.s32.totalorder %s22, 1
      %p186 = por %p184, %p185
      %p188 = scmp.ne.s32.totalorder %s173, %s187
      %p189 = scmp.eq.s32.totalorder %s22, 0
      %p190 = por %p188, %p189
      %s191 = ssub.s32 %s16, %s23
      %p192 = scmp.eq.s32.totalorder %s191, 0
      %s194 = sadd.s32 %s193, 1
      %s195 = scalar_select %p192, %s193, %s194
      %p198 = pneg %p192
      %p199 = scmp.eq.s32.totalorder %s16, 1
      %p200 = por %p198, %p199
      %p201 = scmp.ne.s32.totalorder %s193, %s196
      %p202 = scmp.eq.s32.totalorder %s16, 0
      %p203 = por %p201, %p202
      %p204 = scmp.ne.s32.totalorder %s193, %s196
      %p205 = scmp.eq.s32.totalorder %s21, 1
      %p206 = por %p204, %p205
      %p207 = scmp.ne.s32.totalorder %s196, %s197
      %p208 = scmp.eq.s32.totalorder %s21, 0
      %p209 = por %p207, %p208
      %p210 = scmp.ne.s32.totalorder %s196, %s197
      %p211 = scmp.eq.s32.totalorder %s22, 1
      %p212 = por %p210, %p211
      %p214 = scmp.ne.s32.totalorder %s197, %s213
      %p215 = scmp.eq.s32.totalorder %s22, 0
      %p216 = por %p214, %p215
      %p217 = scmp.le.s32.totalorder 1, %s16
      %p218 = scmp.lt.s32.totalorder %s16, 3
      %p219 = pnand %p217, %p218
      %p220 = pneg %p219
      // Predicated region
      $region9: #{basic_block_forward.1} parent=5 // pred_check
        _
      $region10: #{basic_block_forward.1} parent=5 // pred_check_branch
        %222 = sbr.rel (%p219) target = $region12
      $region11: #{basic_block_forward.1} parent=5 // pred_region
        %s223 = ssub.s32 %s16, 1
        // Predicated region
        $region13: #{basic_block_forward.1} parent=11 // pred_check
          %p224 = pneg %p141
        $region14: #{basic_block_forward.1} parent=11 // pred_check_branch
          %226 = sbr.rel (%p224) target = $region16
        $region15: #{basic_block_forward.1} parent=11 // pred_region
          _
        $region16: #{basic_block_forward.1} parent=11 // pred_fallthru
          _
        // Predicated region
        $region17: #{basic_block_forward.1} parent=11 // pred_check
          %p227 = pneg %p162
        $region18: #{basic_block_forward.1} parent=11 // pred_check_branch
          %229 = sbr.rel (%p227) target = $region20
        $region19: #{basic_block_forward.1} parent=11 // pred_region
          _
        $region20: #{basic_block_forward.1} parent=11 // pred_fallthru
          _
        // Predicated region
        $region21: #{basic_block_forward.1} parent=11 // pred_check
          %p230 = pneg %p183
        $region22: #{basic_block_forward.1} parent=11 // pred_check_branch
          %232 = sbr.rel (%p230) target = $region24
        $region23: #{basic_block_forward.1} parent=11 // pred_region
          _
        $region24: #{basic_block_forward.1} parent=11 // pred_fallthru
          _
      $region12: #{basic_block_forward.1} parent=5 // pred_fallthru
        _
      %p233 = scmp.lt.s32.totalorder %s16, 2
      // Predicated region
      $region25: #{basic_block_forward.1} parent=5 // pred_check
        %p234 = pneg %p233
      $region26: #{basic_block_forward.1} parent=5 // pred_check_branch
        %236 = sbr.rel (%p234) target = $region28
      $region27: #{basic_block_forward.1} parent=5 // pred_region
        // Predicated region
        $region29: #{basic_block_forward.1} parent=27 // pred_check
          %p237 = pneg %p36
        $region30: #{basic_block_forward.1} parent=27 // pred_check_branch
          %239 = sbr.rel (%p237) target = $region32
        $region31: #{basic_block_forward.1} parent=27 // pred_region
          %p240 = scmp.lt.s32.totalorder %s16, 1
          %s241 = scalar_select %p240, %s16, 1
          %s242 = smul.addr %s241, 18
          %s243 = smul.addr %s242, 4
          %s244 = scalar_lea.vmem %s0, %s243
        $region32: #{basic_block_forward.1} parent=27 // pred_fallthru
          _
        // Predicated region
        $region33: #{basic_block_forward.1} parent=27 // pred_check
          %p245 = pneg %p62
        $region34: #{basic_block_forward.1} parent=27 // pred_check_branch
          %247 = sbr.rel (%p245) target = $region36
        $region35: #{basic_block_forward.1} parent=27 // pred_region
          %p248 = scmp.lt.s32.totalorder %s16, 1
          %s249 = scalar_select %p248, %s16, 1
          %s250 = smul.addr %s249, 18
          %s251 = smul.addr %s250, 4
          %s252 = scalar_lea.vmem %s1, %s251
        $region36: #{basic_block_forward.1} parent=27 // pred_fallthru
          _
        // Predicated region
        $region37: #{basic_block_forward.1} parent=27 // pred_check
          %p253 = pneg %p88
        $region38: #{basic_block_forward.1} parent=27 // pred_check_branch
          %255 = sbr.rel (%p253) target = $region40
        $region39: #{basic_block_forward.1} parent=27 // pred_region
          %p256 = scmp.lt.s32.totalorder %s16, 1
          %s257 = scalar_select %p256, %s16, 1
          %s258 = smul.addr %s257, 18
          %s259 = smul.addr %s258, 4
          %s260 = scalar_lea.vmem %s2, %s259
        $region40: #{basic_block_forward.1} parent=27 // pred_fallthru
          _
        // Predicated region
        $region41: #{basic_block_forward.1} parent=27 // pred_check
          %p261 = pneg %p114
        $region42: #{basic_block_forward.1} parent=27 // pred_check_branch
          %263 = sbr.rel (%p261) target = $region44
        $region43: #{basic_block_forward.1} parent=27 // pred_region
          %p264 = scmp.lt.s32.totalorder %s16, 1
          %s265 = scalar_select %p264, %s16, 1
          %s266 = smul.addr %s265, 18
          %s267 = smul.addr %s266, 4
          %s268 = scalar_lea.vmem %s3, %s267
        $region44: #{basic_block_forward.1} parent=27 // pred_fallthru
          _
      $region28: #{basic_block_forward.1} parent=5 // pred_fallthru
        _
      %p269 = scmp.le.s32.totalorder 1, %s16
      %p270 = scmp.lt.s32.totalorder %s16, 3
      %p271 = pnand %p269, %p270
      %p272 = pneg %p271
      // Predicated region
      $region45: #{basic_block_forward.1} parent=5 // pred_check
        _
      $region46: #{basic_block_forward.1} parent=5 // pred_check_branch
        %274 = sbr.rel (%p271) target = $region48
      $region47: #{basic_block_forward.1} parent=5 // pred_region
        %s275 = ssub.s32 %s16, 1
        %p276 = scmp.lt.s32.totalorder %s21, 1
        %s277 = scalar_select %p276, %s21, 1
        %s278 = smul.addr %s277, 18
        %s279 = smul.addr %s278, 4
        %s280 = scalar_lea.vmem %s0, %s279
        %p281 = pneg %p42
        %p282 = pneg %p39
        %p283 = scmp.lt.s32.totalorder %s21, 1
        %s284 = scalar_select %p283, %s21, 1
        %s285 = smul.addr %s284, 18
        %s286 = smul.addr %s285, 4
        %s287 = scalar_lea.vmem %s1, %s286
        %p288 = pneg %p68
        %p289 = pneg %p65
        %p290 = scmp.lt.s32.totalorder %s21, 1
        %s291 = scalar_select %p290, %s21, 1
        %s292 = smul.addr %s291, 18
        %s293 = smul.addr %s292, 4
        %s294 = scalar_lea.vmem %s2, %s293
        %p295 = pneg %p94
        %p296 = pneg %p91
        %p297 = scmp.lt.s32.totalorder %s21, 1
        %s298 = scalar_select %p297, %s21, 1
        %s299 = smul.addr %s298, 18
        %s300 = smul.addr %s299, 4
        %s301 = scalar_lea.vmem %s3, %s300
        %p302 = pneg %p120
        %p303 = pneg %p117
        %p304 = pneg %p141
        %p305 = pneg %p138
        %p306 = pneg %p162
        %p307 = pneg %p159
        %p308 = pneg %p183
        %p309 = pneg %p180
        %p310 = pneg %p209
        %p311 = pneg %p206
        %s312 = sand.u32 %s196, 1
        %s313 = scalar_lea.sflag [#allocation4], %s312
        %s314 = sand.u32 %s196, 1
        %s315 = smul.addr %s314, 64
        %s316 = scalar_lea.vmem [#allocation3], %s315
        %p317 = scmp.lt.s32.totalorder %s21, 1
        %s318 = scalar_select %p317, %s21, 1
        %s319 = smul.addr %s318, 18
        %s320 = smul.addr %s319, 4
        %s321 = scalar_lea.vmem %s0, %s320
        %p322 = scmp.lt.s32.totalorder %s21, 1
        %s323 = scalar_select %p322, %s21, 1
        %s324 = smul.addr %s323, 18
        %s325 = smul.addr %s324, 4
        %s326 = scalar_lea.vmem %s1, %s325
        %p327 = scmp.lt.s32.totalorder %s21, 1
        %s328 = scalar_select %p327, %s21, 1
        %s329 = smul.addr %s328, 18
        %s330 = smul.addr %s329, 4
        %s331 = scalar_lea.vmem %s2, %s330
        %p332 = scmp.lt.s32.totalorder %s21, 1
        %s333 = scalar_select %p332, %s21, 1
        %s334 = smul.addr %s333, 18
        %s335 = smul.addr %s334, 4
        %s336 = scalar_lea.vmem %s3, %s335
        %v338 = vld [vmem:[%s321] sm:$0xf]
        %v339 = vld [vmem:[%s321 + $0x8] sm:$0xf]
        %v340 = vld [vmem:[%s321 + $0x10] sm:$0xf]
        %v341 = vld [vmem:[%s321 + $0x18] sm:$0xf]
        %v342 = vld [vmem:[%s321 + $0x20] sm:$0xf]
        %v343 = vld [vmem:[%s321 + $0x28] sm:$0xf]
        %v344 = vld [vmem:[%s321 + $0x30] sm:$0xf]
        %v345 = vld [vmem:[%s321 + $0x38] sm:$0xf]
        %v346 = vld [vmem:[%s326] sm:$0xf]
        %v347 = vld [vmem:[%s326 + $0x8] sm:$0xf]
        %v348 = vld [vmem:[%s326 + $0x10] sm:$0xf]
        %v349 = vld [vmem:[%s326 + $0x18] sm:$0xf]
        %v350 = vld [vmem:[%s326 + $0x20] sm:$0xf]
        %v351 = vld [vmem:[%s326 + $0x28] sm:$0xf]
        %v352 = vld [vmem:[%s326 + $0x30] sm:$0xf]
        %v353 = vld [vmem:[%s326 + $0x38] sm:$0xf]
        %v354 = vld [vmem:[%s321 + $0x4] sm:$0x1]
        %v355 = vld [vmem:[%s321 + $0xc] sm:$0x1]
        %v356 = vld [vmem:[%s321 + $0x14] sm:$0x1]
        %v357 = vld [vmem:[%s321 + $0x1c] sm:$0x1]
        %v358 = vld [vmem:[%s321 + $0x24] sm:$0x1]
        %v359 = vld [vmem:[%s321 + $0x2c] sm:$0x1]
        %v360 = vld [vmem:[%s321 + $0x34] sm:$0x1]
        %v361 = vld [vmem:[%s321 + $0x3c] sm:$0x1]
        %vm362 = vsmask.f32 3328
        %vm363 = vsmask.f32 7440
        %vm364 = vmor %vm362, %vm363
        %v366 = vshrl.u32 %v338, 16
        %v368 = vrot.slane %v366, 4
        %v369 = vshll.u32 %v338, 16
        %v371 = vrot.slane %v369, 5
        %v372 = vor.u32 %v368, %v371
        %v373 = vrot.slane %v372, 4
        %v375 = vshll.u32 %v354, 16
        %v377 = vrot.slane %v375, 5
        %v378 = vsel %vm364, %v373, %v377
        %v380 = vshrl.u32 %v339, 16
        %v382 = vrot.slane %v380, 4
        %v383 = vshll.u32 %v339, 16
        %v385 = vrot.slane %v383, 5
        %v386 = vor.u32 %v382, %v385
        %v387 = vrot.slane %v386, 4
        %v389 = vshll.u32 %v355, 16
        %v391 = vrot.slane %v389, 5
        %v392 = vsel %vm364, %v387, %v391
        %v394 = vshrl.u32 %v340, 16
        %v396 = vrot.slane %v394, 4
        %v397 = vshll.u32 %v340, 16
        %v399 = vrot.slane %v397, 5
        %v400 = vor.u32 %v396, %v399
        %v401 = vrot.slane %v400, 4
        %v403 = vshll.u32 %v356, 16
        %v405 = vrot.slane %v403, 5
        %v406 = vsel %vm364, %v401, %v405
        %v408 = vshrl.u32 %v341, 16
        %v410 = vrot.slane %v408, 4
        %v411 = vshll.u32 %v341, 16
        %v413 = vrot.slane %v411, 5
        %v414 = vor.u32 %v410, %v413
        %v415 = vrot.slane %v414, 4
        %v417 = vshll.u32 %v357, 16
        %v419 = vrot.slane %v417, 5
        %v420 = vsel %vm364, %v415, %v419
        %v422 = vshrl.u32 %v342, 16
        %v424 = vrot.slane %v422, 4
        %v425 = vshll.u32 %v342, 16
        %v427 = vrot.slane %v425, 5
        %v428 = vor.u32 %v424, %v427
        %v429 = vrot.slane %v428, 4
        %v431 = vshll.u32 %v358, 16
        %v433 = vrot.slane %v431, 5
        %v434 = vsel %vm364, %v429, %v433
        %v436 = vshrl.u32 %v343, 16
        %v438 = vrot.slane %v436, 4
        %v439 = vshll.u32 %v343, 16
        %v441 = vrot.slane %v439, 5
        %v442 = vor.u32 %v438, %v441
        %v443 = vrot.slane %v442, 4
        %v445 = vshll.u32 %v359, 16
        %v447 = vrot.slane %v445, 5
        %v448 = vsel %vm364, %v443, %v447
        %v450 = vshrl.u32 %v344, 16
        %v452 = vrot.slane %v450, 4
        %v453 = vshll.u32 %v344, 16
        %v455 = vrot.slane %v453, 5
        %v456 = vor.u32 %v452, %v455
        %v457 = vrot.slane %v456, 4
        %v459 = vshll.u32 %v360, 16
        %v461 = vrot.slane %v459, 5
        %v462 = vsel %vm364, %v457, %v461
        %v464 = vshrl.u32 %v345, 16
        %v466 = vrot.slane %v464, 4
        %v467 = vshll.u32 %v345, 16
        %v469 = vrot.slane %v467, 5
        %v470 = vor.u32 %v466, %v469
        %v471 = vrot.slane %v470, 4
        %v473 = vshll.u32 %v361, 16
        %v475 = vrot.slane %v473, 5
        %v476 = vsel %vm364, %v471, %v475
        %v485 = vunpack.c.l.b16 %v338
        %v486 = vunpack.c.l.b16 %v339
        %v487 = vunpack.c.l.b16 %v340
        %v488 = vunpack.c.l.b16 %v341
        %v489 = vunpack.c.l.b16 %v342
        %v490 = vunpack.c.l.b16 %v343
        %v491 = vunpack.c.l.b16 %v344
        %v492 = vunpack.c.l.b16 %v345
        %v493 = vpack.c.b16 %v486, %v485
        %v494 = vpack.c.b16 %v488, %v487
        %v495 = vpack.c.b16 %v490, %v489
        %v496 = vpack.c.b16 %v492, %v491
        %v505 = vunpack.c.l.b16 %v346
        %v506 = vunpack.c.l.b16 %v347
        %v507 = vunpack.c.l.b16 %v348
        %v508 = vunpack.c.l.b16 %v349
        %v509 = vunpack.c.l.b16 %v350
        %v510 = vunpack.c.l.b16 %v351
        %v511 = vunpack.c.l.b16 %v352
        %v512 = vunpack.c.l.b16 %v353
        %v513 = vpack.c.b16 %v506, %v505
        %v514 = vpack.c.b16 %v508, %v507
        %v515 = vpack.c.b16 %v510, %v509
        %v516 = vpack.c.b16 %v512, %v511
        %517 = vrot.lane.b32.xlu0 %v513, 16
        %v518 = vpop.permute.xlu0 %517
        %519 = vrot.lane.b32.xlu0 %v514, 16
        %v520 = vpop.permute.xlu0 %519
        %521 = vrot.lane.b32.xlu0 %v515, 16
        %v522 = vpop.permute.xlu0 %521
        %523 = vrot.lane.b32.xlu0 %v516, 16
        %v524 = vpop.permute.xlu0 %523
        %v525 = vunpack.c.l.b16 %v378
        %v526 = vunpack.c.l.b16 %v392
        %v527 = vunpack.c.l.b16 %v406
        %v528 = vunpack.c.l.b16 %v420
        %v529 = vunpack.c.l.b16 %v434
        %v530 = vunpack.c.l.b16 %v448
        %v531 = vunpack.c.l.b16 %v462
        %v532 = vunpack.c.l.b16 %v476
        %v533 = vpack.c.b16 %v526, %v525
        %v534 = vpack.c.b16 %v528, %v527
        %v535 = vpack.c.b16 %v530, %v529
        %v536 = vpack.c.b16 %v532, %v531
        %537 = vrot.lane.b32.xlu0 %v533, 32
        %v538 = vpop.permute.xlu0 %537
        %539 = vrot.lane.b32.xlu0 %v534, 32
        %v540 = vpop.permute.xlu0 %539
        %541 = vrot.lane.b32.xlu0 %v535, 32
        %v542 = vpop.permute.xlu0 %541
        %543 = vrot.lane.b32.xlu0 %v536, 32
        %v544 = vpop.permute.xlu0 %543
        %vm545 = vcmask 130048
        %v548 = vsel %vm545, %v493, %v518
        %v551 = vsel %vm545, %v494, %v520
        %v554 = vsel %vm545, %v495, %v522
        %v557 = vsel %vm545, %v496, %v524
        %vm558 = vcmask 261120
        %v560 = vsel %vm558, %v548, %v538
        %v562 = vsel %vm558, %v551, %v540
        %v564 = vsel %vm558, %v554, %v542
        %v566 = vsel %vm558, %v557, %v544
        %v567 = vld [vmem:[%s4] sm:$0xf]
        %v568 = vld [vmem:[%s4 + $0x4] sm:$0xf]
        %v569 = vld [vmem:[%s4 + $0x8] sm:$0xf]
        %v570 = vld [vmem:[%s4 + $0xc] sm:$0xf]
        %v571 = vld [vmem:[%s4 + $0x10] sm:$0xf]
        %v572 = vld [vmem:[%s4 + $0x14] sm:$0xf]
        %v573 = vld [vmem:[%s331] sm:$0xf]
        %v574 = vld [vmem:[%s331 + $0x8] sm:$0xf]
        %v575 = vld [vmem:[%s331 + $0x10] sm:$0xf]
        %v576 = vld [vmem:[%s331 + $0x18] sm:$0xf]
        %v577 = vld [vmem:[%s331 + $0x20] sm:$0xf]
        %v578 = vld [vmem:[%s331 + $0x28] sm:$0xf]
        %v579 = vld [vmem:[%s331 + $0x30] sm:$0xf]
        %v580 = vld [vmem:[%s331 + $0x38] sm:$0xf]
        %v581 = vld [vmem:[%s336] sm:$0xf]
        %v582 = vld [vmem:[%s336 + $0x8] sm:$0xf]
        %v583 = vld [vmem:[%s336 + $0x10] sm:$0xf]
        %v584 = vld [vmem:[%s336 + $0x18] sm:$0xf]
        %v585 = vld [vmem:[%s336 + $0x20] sm:$0xf]
        %v586 = vld [vmem:[%s336 + $0x28] sm:$0xf]
        %v587 = vld [vmem:[%s336 + $0x30] sm:$0xf]
        %v588 = vld [vmem:[%s336 + $0x38] sm:$0xf]
        %v589 = vld [vmem:[%s331 + $0x4] sm:$0x1]
        %v590 = vld [vmem:[%s331 + $0xc] sm:$0x1]
        %v591 = vld [vmem:[%s331 + $0x14] sm:$0x1]
        %v592 = vld [vmem:[%s331 + $0x1c] sm:$0x1]
        %v593 = vld [vmem:[%s331 + $0x24] sm:$0x1]
        %v594 = vld [vmem:[%s331 + $0x2c] sm:$0x1]
        %v595 = vld [vmem:[%s331 + $0x34] sm:$0x1]
        %v596 = vld [vmem:[%s331 + $0x3c] sm:$0x1]
        %v598 = vshrl.u32 %v573, 16
        %v600 = vrot.slane %v598, 4
        %v601 = vshll.u32 %v573, 16
        %v603 = vrot.slane %v601, 5
        %v604 = vor.u32 %v600, %v603
        %v605 = vrot.slane %v604, 4
        %v607 = vshll.u32 %v589, 16
        %v609 = vrot.slane %v607, 5
        %v610 = vsel %vm364, %v605, %v609
        %v612 = vshrl.u32 %v574, 16
        %v614 = vrot.slane %v612, 4
        %v615 = vshll.u32 %v574, 16
        %v617 = vrot.slane %v615, 5
        %v618 = vor.u32 %v614, %v617
        %v619 = vrot.slane %v618, 4
        %v621 = vshll.u32 %v590, 16
        %v623 = vrot.slane %v621, 5
        %v624 = vsel %vm364, %v619, %v623
        %v626 = vshrl.u32 %v575, 16
        %v628 = vrot.slane %v626, 4
        %v629 = vshll.u32 %v575, 16
        %v631 = vrot.slane %v629, 5
        %v632 = vor.u32 %v628, %v631
        %v633 = vrot.slane %v632, 4
        %v635 = vshll.u32 %v591, 16
        %v637 = vrot.slane %v635, 5
        %v638 = vsel %vm364, %v633, %v637
        %v640 = vshrl.u32 %v576, 16
        %v642 = vrot.slane %v640, 4
        %v643 = vshll.u32 %v576, 16
        %v645 = vrot.slane %v643, 5
        %v646 = vor.u32 %v642, %v645
        %v647 = vrot.slane %v646, 4
        %v649 = vshll.u32 %v592, 16
        %v651 = vrot.slane %v649, 5
        %v652 = vsel %vm364, %v647, %v651
        %v654 = vshrl.u32 %v577, 16
        %v656 = vrot.slane %v654, 4
        %v657 = vshll.u32 %v577, 16
        %v659 = vrot.slane %v657, 5
        %v660 = vor.u32 %v656, %v659
        %v661 = vrot.slane %v660, 4
        %v663 = vshll.u32 %v593, 16
        %v665 = vrot.slane %v663, 5
        %v666 = vsel %vm364, %v661, %v665
        %v668 = vshrl.u32 %v578, 16
        %v670 = vrot.slane %v668, 4
        %v671 = vshll.u32 %v578, 16
        %v673 = vrot.slane %v671, 5
        %v674 = vor.u32 %v670, %v673
        %v675 = vrot.slane %v674, 4
        %v677 = vshll.u32 %v594, 16
        %v679 = vrot.slane %v677, 5
        %v680 = vsel %vm364, %v675, %v679
        %v682 = vshrl.u32 %v579, 16
        %v684 = vrot.slane %v682, 4
        %v685 = vshll.u32 %v579, 16
        %v687 = vrot.slane %v685, 5
        %v688 = vor.u32 %v684, %v687
        %v689 = vrot.slane %v688, 4
        %v691 = vshll.u32 %v595, 16
        %v693 = vrot.slane %v691, 5
        %v694 = vsel %vm364, %v689, %v693
        %v696 = vshrl.u32 %v580, 16
        %v698 = vrot.slane %v696, 4
        %v699 = vshll.u32 %v580, 16
        %v701 = vrot.slane %v699, 5
        %v702 = vor.u32 %v698, %v701
        %v703 = vrot.slane %v702, 4
        %v705 = vshll.u32 %v596, 16
        %v707 = vrot.slane %v705, 5
        %v708 = vsel %vm364, %v703, %v707
        %v717 = vunpack.c.l.b16 %v573
        %v718 = vunpack.c.l.b16 %v574
        %v719 = vunpack.c.l.b16 %v575
        %v720 = vunpack.c.l.b16 %v576
        %v721 = vunpack.c.l.b16 %v577
        %v722 = vunpack.c.l.b16 %v578
        %v723 = vunpack.c.l.b16 %v579
        %v724 = vunpack.c.l.b16 %v580
        %v725 = vpack.c.b16 %v718, %v717
        %v726 = vpack.c.b16 %v720, %v719
        %v727 = vpack.c.b16 %v722, %v721
        %v728 = vpack.c.b16 %v724, %v723
        %v737 = vunpack.c.l.b16 %v581
        %v738 = vunpack.c.l.b16 %v582
        %v739 = vunpack.c.l.b16 %v583
        %v740 = vunpack.c.l.b16 %v584
        %v741 = vunpack.c.l.b16 %v585
        %v742 = vunpack.c.l.b16 %v586
        %v743 = vunpack.c.l.b16 %v587
        %v744 = vunpack.c.l.b16 %v588
        %v745 = vpack.c.b16 %v738, %v737
        %v746 = vpack.c.b16 %v740, %v739
        %v747 = vpack.c.b16 %v742, %v741
        %v748 = vpack.c.b16 %v744, %v743
        %749 = vrot.lane.b32.xlu0 %v745, 16
        %v750 = vpop.permute.xlu0 %749
        %751 = vrot.lane.b32.xlu0 %v746, 16
        %v752 = vpop.permute.xlu0 %751
        %753 = vrot.lane.b32.xlu0 %v747, 16
        %v754 = vpop.permute.xlu0 %753
        %755 = vrot.lane.b32.xlu0 %v748, 16
        %v756 = vpop.permute.xlu0 %755
        %v757 = vunpack.c.l.b16 %v610
        %v758 = vunpack.c.l.b16 %v624
        %v759 = vunpack.c.l.b16 %v638
        %v760 = vunpack.c.l.b16 %v652
        %v761 = vunpack.c.l.b16 %v666
        %v762 = vunpack.c.l.b16 %v680
        %v763 = vunpack.c.l.b16 %v694
        %v764 = vunpack.c.l.b16 %v708
        %v765 = vpack.c.b16 %v758, %v757
        %v766 = vpack.c.b16 %v760, %v759
        %v767 = vpack.c.b16 %v762, %v761
        %v768 = vpack.c.b16 %v764, %v763
        %769 = vrot.lane.b32.xlu0 %v765, 32
        %v770 = vpop.permute.xlu0 %769
        %771 = vrot.lane.b32.xlu0 %v766, 32
        %v772 = vpop.permute.xlu0 %771
        %773 = vrot.lane.b32.xlu0 %v767, 32
        %v774 = vpop.permute.xlu0 %773
        %775 = vrot.lane.b32.xlu0 %v768, 32
        %v776 = vpop.permute.xlu0 %775
        %v779 = vsel %vm545, %v725, %v750
        %v782 = vsel %vm545, %v726, %v752
        %v785 = vsel %vm545, %v727, %v754
        %v788 = vsel %vm545, %v728, %v756
        %v790 = vsel %vm558, %v779, %v770
        %v792 = vsel %vm558, %v782, %v772
        %v794 = vsel %vm558, %v785, %v774
        %v796 = vsel %vm558, %v788, %v776
        %s797 = scalar_lea.vmem %s4, 24
        %v798 = vld [vmem:[%s797] sm:$0xf]
        %v799 = vld [vmem:[%s797 + $0x4] sm:$0xf]
        %v800 = vld [vmem:[%s797 + $0x8] sm:$0xf]
        %v801 = vld [vmem:[%s797 + $0xc] sm:$0xf]
        %v802 = vld [vmem:[%s797 + $0x10] sm:$0xf]
        %v803 = vld [vmem:[%s797 + $0x14] sm:$0xf]
        %v810 = vunpack.c.l.b16 %v798
        %v811 = vunpack.c.l.b16 %v799
        %v812 = vunpack.c.l.b16 %v800
        %v813 = vunpack.c.l.b16 %v801
        %v814 = vunpack.c.l.b16 %v802
        %v815 = vunpack.c.l.b16 %v803
        %v816 = vpack.c.b16 %v811, %v810
        %v817 = vpack.c.b16 %v813, %v812
        %v818 = vpack.c.b16 %v815, %v814
        %vm822 = vcmask 392192
        %v823 = vsel %vm822, %v790, 0
        %v825 = vsel %vm822, %v792, 0
        %v827 = vsel %vm822, %v794, 0
        %v829 = vsel %vm822, %v796, 0
        %831 = vmatprep.subr.bf16.mxu0 0
        %832 = vmatpush1.bf16.msra.mxu0 0
        %833 = vmatprep.subr.bf16.mxu0 0
        %834 = vmatpush1.bf16.msra.mxu0 0
        %835 = vmatprep.subr.bf16.mxu0 0
        %836 = vmatpush1.bf16.msra.mxu0 0
        %837 = vmatprep.subr.bf16.mxu0 0
        %838 = vmatpush1.bf16.msra.mxu0 0
        %839 = vmatprep.subr.bf16.mxu0 0
        %840 = vmatpush1.bf16.msra.mxu0 0
        %841 = vmatprep.subr.bf16.mxu0 0
        %842 = vmatpush1.bf16.msra.mxu0 %v818
        %843 = vmatprep.subr.bf16.mxu0 0
        %844 = vmatpush1.bf16.msra.mxu0 %v817
        %845 = vmatprep.subr.bf16.mxu0 0
        %846 = vmatpush1.bf16.msra.mxu0 %v816
        %847 = vmatprep.subr.bf16.mxu0 0
        %848 = vmatpush2.bf16.msra.mxu0 0
        %849 = vmatprep.subr.bf16.mxu0 0
        %850 = vmatpush2.bf16.msra.mxu0 0
        %851 = vmatprep.subr.bf16.mxu0 0
        %852 = vmatpush2.bf16.msra.mxu0 0
        %853 = vmatprep.subr.bf16.mxu0 0
        %854 = vmatpush2.bf16.msra.mxu0 0
        %855 = vmatprep.subr.bf16.mxu0 0
        %856 = vmatpush2.bf16.msra.mxu0 0
        %857 = vmatprep.subr.bf16.mxu0 0
        %858 = vmatpush2.bf16.msra.mxu0 0
        %859 = vmatprep.subr.bf16.mxu0 0
        %860 = vmatpush2.bf16.msra.mxu0 0
        %861 = vmatprep.subr.bf16.mxu0 0
        %862 = vmatpush2.bf16.msra.mxu0 0
        %863 = vmatprep.mubr.bf16.mxu0 0
        %864 = vmatmul.mubr.bf16.gmra.mxu0 %v823
        %v865 = vpop.f32.mrf.mxu0
        %v866 = vadd.f32 0.0, %v865
        %v867 = vpop.f32.mrf.mxu0
        %v868 = vpop.f32.mrf.mxu0
        %v869 = vadd.f32 0.0, %v868
        %v870 = vpop.f32.mrf.mxu0
        %871 = vmatprep.mubr.bf16.mxu0 0
        %872 = vmatmul.mubr.bf16.gmra.mxu0 %v825
        %v873 = vpop.f32.mrf.mxu0
        %v874 = vadd.f32 0.0, %v873
        %v875 = vpop.f32.mrf.mxu0
        %v876 = vpop.f32.mrf.mxu0
        %v877 = vadd.f32 0.0, %v876
        %v878 = vpop.f32.mrf.mxu0
        %879 = vmatprep.mubr.bf16.mxu0 0
        %880 = vmatmul.mubr.bf16.gmra.mxu0 %v827
        %v881 = vpop.f32.mrf.mxu0
        %v882 = vadd.f32 0.0, %v881
        %v883 = vpop.f32.mrf.mxu0
        %v884 = vpop.f32.mrf.mxu0
        %v885 = vadd.f32 0.0, %v884
        %v886 = vpop.f32.mrf.mxu0
        %887 = vmatprep.mubr.bf16.mxu0 0
        %888 = vmatmul.mubr.bf16.gmra.mxu0 %v829
        %v889 = vpop.f32.mrf.mxu0
        %v890 = vadd.f32 0.0, %v889
        %v891 = vpop.f32.mrf.mxu0
        %v892 = vpop.f32.mrf.mxu0
        %v893 = vadd.f32 0.0, %v892
        %v894 = vpop.f32.mrf.mxu0
        %895 = vdwg.mxu0
        %v902 = vunpack.c.l.b16 %v567
        %v903 = vunpack.c.l.b16 %v568
        %v904 = vunpack.c.l.b16 %v569
        %v905 = vunpack.c.l.b16 %v570
        %v906 = vunpack.c.l.b16 %v571
        %v907 = vunpack.c.l.b16 %v572
        %v908 = vpack.c.b16 %v903, %v902
        %v909 = vpack.c.b16 %v905, %v904
        %v910 = vpack.c.b16 %v907, %v906
        %v914 = vsel %vm822, %v560, 0
        %v916 = vsel %vm822, %v562, 0
        %v918 = vsel %vm822, %v564, 0
        %v920 = vsel %vm822, %v566, 0
        %922 = vmatprep.subr.bf16.mxu0 0
        %923 = vmatpush1.bf16.msra.mxu0 0
        %924 = vmatprep.subr.bf16.mxu0 0
        %925 = vmatpush1.bf16.msra.mxu0 0
        %926 = vmatprep.subr.bf16.mxu0 0
        %927 = vmatpush1.bf16.msra.mxu0 0
        %928 = vmatprep.subr.bf16.mxu0 0
        %929 = vmatpush1.bf16.msra.mxu0 0
        %930 = vmatprep.subr.bf16.mxu0 0
        %931 = vmatpush1.bf16.msra.mxu0 0
        %932 = vmatprep.subr.bf16.mxu0 0
        %933 = vmatpush1.bf16.msra.mxu0 %v910
        %934 = vmatprep.subr.bf16.mxu0 0
        %935 = vmatpush1.bf16.msra.mxu0 %v909
        %936 = vmatprep.subr.bf16.mxu0 0
        %937 = vmatpush1.bf16.msra.mxu0 %v908
        %938 = vmatprep.subr.bf16.mxu0 0
        %939 = vmatpush2.bf16.msra.mxu0 0
        %940 = vmatprep.subr.bf16.mxu0 0
        %941 = vmatpush2.bf16.msra.mxu0 0
        %942 = vmatprep.subr.bf16.mxu0 0
        %943 = vmatpush2.bf16.msra.mxu0 0
        %944 = vmatprep.subr.bf16.mxu0 0
        %945 = vmatpush2.bf16.msra.mxu0 0
        %946 = vmatprep.subr.bf16.mxu0 0
        %947 = vmatpush2.bf16.msra.mxu0 0
        %948 = vmatprep.subr.bf16.mxu0 0
        %949 = vmatpush2.bf16.msra.mxu0 0
        %950 = vmatprep.subr.bf16.mxu0 0
        %951 = vmatpush2.bf16.msra.mxu0 0
        %952 = vmatprep.subr.bf16.mxu0 0
        %953 = vmatpush2.bf16.msra.mxu0 0
        %954 = vmatprep.mubr.bf16.mxu0 0
        %955 = vmatmul.mubr.bf16.gmra.mxu0 %v914
        %v956 = vpop.f32.mrf.mxu0
        %v957 = vadd.f32 %v866, %v956
        %v958 = vpop.f32.mrf.mxu0
        %v959 = vpop.f32.mrf.mxu0
        %v960 = vadd.f32 %v869, %v959
        %v961 = vpop.f32.mrf.mxu0
        %962 = vmatprep.mubr.bf16.mxu0 0
        %963 = vmatmul.mubr.bf16.gmra.mxu0 %v916
        %v964 = vpop.f32.mrf.mxu0
        %v965 = vadd.f32 %v874, %v964
        %v966 = vpop.f32.mrf.mxu0
        %v967 = vpop.f32.mrf.mxu0
        %v968 = vadd.f32 %v877, %v967
        %v969 = vpop.f32.mrf.mxu0
        %970 = vmatprep.mubr.bf16.mxu0 0
        %971 = vmatmul.mubr.bf16.gmra.mxu0 %v918
        %v972 = vpop.f32.mrf.mxu0
        %v973 = vadd.f32 %v882, %v972
        %v974 = vpop.f32.mrf.mxu0
        %v975 = vpop.f32.mrf.mxu0
        %v976 = vadd.f32 %v885, %v975
        %v977 = vpop.f32.mrf.mxu0
        %978 = vmatprep.mubr.bf16.mxu0 0
        %979 = vmatmul.mubr.bf16.gmra.mxu0 %v920
        %v980 = vpop.f32.mrf.mxu0
        %v981 = vadd.f32 %v890, %v980
        %v982 = vpop.f32.mrf.mxu0
        %v983 = vpop.f32.mrf.mxu0
        %v984 = vadd.f32 %v893, %v983
        %v985 = vpop.f32.mrf.mxu0
        %986 = vdwg.mxu0
        %s987 = scalar_lea.vmem %s321, 8
        %v988 = vld [vmem:[%s987] sm:$0xf]
        %v989 = vld [vmem:[%s987 + $0x8] sm:$0xf]
        %v990 = vld [vmem:[%s987 + $0x10] sm:$0xf]
        %v991 = vld [vmem:[%s987 + $0x18] sm:$0xf]
        %v992 = vld [vmem:[%s987 + $0x20] sm:$0xf]
        %v993 = vld [vmem:[%s987 + $0x28] sm:$0xf]
        %v994 = vld [vmem:[%s987 + $0x30] sm:$0xf]
        %v995 = vld [vmem:[%s987 + $0x38] sm:$0xf]
        %s996 = scalar_lea.vmem %s326, 8
        %v997 = vld [vmem:[%s996] sm:$0xf]
        %v998 = vld [vmem:[%s996 + $0x8] sm:$0xf]
        %v999 = vld [vmem:[%s996 + $0x10] sm:$0xf]
        %v1000 = vld [vmem:[%s996 + $0x18] sm:$0xf]
        %v1001 = vld [vmem:[%s996 + $0x20] sm:$0xf]
        %v1002 = vld [vmem:[%s996 + $0x28] sm:$0xf]
        %v1003 = vld [vmem:[%s996 + $0x30] sm:$0xf]
        %v1004 = vld [vmem:[%s996 + $0x38] sm:$0xf]
        %v1005 = vld [vmem:[%s987 + $0x4] sm:$0x1]
        %v1006 = vld [vmem:[%s987 + $0xc] sm:$0x1]
        %v1007 = vld [vmem:[%s987 + $0x14] sm:$0x1]
        %v1008 = vld [vmem:[%s987 + $0x1c] sm:$0x1]
        %v1009 = vld [vmem:[%s987 + $0x24] sm:$0x1]
        %v1010 = vld [vmem:[%s987 + $0x2c] sm:$0x1]
        %v1011 = vld [vmem:[%s987 + $0x34] sm:$0x1]
        %v1012 = vld [vmem:[%s987 + $0x3c] sm:$0x1]
        %v1014 = vshrl.u32 %v988, 16
        %v1016 = vrot.slane %v1014, 4
        %v1017 = vshll.u32 %v988, 16
        %v1019 = vrot.slane %v1017, 5
        %v1020 = vor.u32 %v1016, %v1019
        %v1021 = vrot.slane %v1020, 4
        %v1023 = vshll.u32 %v1005, 16
        %v1025 = vrot.slane %v1023, 5
        %v1026 = vsel %vm364, %v1021, %v1025
        %v1028 = vshrl.u32 %v989, 16
        %v1030 = vrot.slane %v1028, 4
        %v1031 = vshll.u32 %v989, 16
        %v1033 = vrot.slane %v1031, 5
        %v1034 = vor.u32 %v1030, %v1033
        %v1035 = vrot.slane %v1034, 4
        %v1037 = vshll.u32 %v1006, 16
        %v1039 = vrot.slane %v1037, 5
        %v1040 = vsel %vm364, %v1035, %v1039
        %v1042 = vshrl.u32 %v990, 16
        %v1044 = vrot.slane %v1042, 4
        %v1045 = vshll.u32 %v990, 16
        %v1047 = vrot.slane %v1045, 5
        %v1048 = vor.u32 %v1044, %v1047
        %v1049 = vrot.slane %v1048, 4
        %v1051 = vshll.u32 %v1007, 16
        %v1053 = vrot.slane %v1051, 5
        %v1054 = vsel %vm364, %v1049, %v1053
        %v1056 = vshrl.u32 %v991, 16
        %v1058 = vrot.slane %v1056, 4
        %v1059 = vshll.u32 %v991, 16
        %v1061 = vrot.slane %v1059, 5
        %v1062 = vor.u32 %v1058, %v1061
        %v1063 = vrot.slane %v1062, 4
        %v1065 = vshll.u32 %v1008, 16
        %v1067 = vrot.slane %v1065, 5
        %v1068 = vsel %vm364, %v1063, %v1067
        %v1070 = vshrl.u32 %v992, 16
        %v1072 = vrot.slane %v1070, 4
        %v1073 = vshll.u32 %v992, 16
        %v1075 = vrot.slane %v1073, 5
        %v1076 = vor.u32 %v1072, %v1075
        %v1077 = vrot.slane %v1076, 4
        %v1079 = vshll.u32 %v1009, 16
        %v1081 = vrot.slane %v1079, 5
        %v1082 = vsel %vm364, %v1077, %v1081
        %v1084 = vshrl.u32 %v993, 16
        %v1086 = vrot.slane %v1084, 4
        %v1087 = vshll.u32 %v993, 16
        %v1089 = vrot.slane %v1087, 5
        %v1090 = vor.u32 %v1086, %v1089
        %v1091 = vrot.slane %v1090, 4
        %v1093 = vshll.u32 %v1010, 16
        %v1095 = vrot.slane %v1093, 5
        %v1096 = vsel %vm364, %v1091, %v1095
        %v1098 = vshrl.u32 %v994, 16
        %v1100 = vrot.slane %v1098, 4
        %v1101 = vshll.u32 %v994, 16
        %v1103 = vrot.slane %v1101, 5
        %v1104 = vor.u32 %v1100, %v1103
        %v1105 = vrot.slane %v1104, 4
        %v1107 = vshll.u32 %v1011, 16
        %v1109 = vrot.slane %v1107, 5
        %v1110 = vsel %vm364, %v1105, %v1109
        %v1112 = vshrl.u32 %v995, 16
        %v1114 = vrot.slane %v1112, 4
        %v1115 = vshll.u32 %v995, 16
        %v1117 = vrot.slane %v1115, 5
        %v1118 = vor.u32 %v1114, %v1117
        %v1119 = vrot.slane %v1118, 4
        %v1121 = vshll.u32 %v1012, 16
        %v1123 = vrot.slane %v1121, 5
        %v1124 = vsel %vm364, %v1119, %v1123
        %v1133 = vunpack.c.l.b16 %v988
        %v1134 = vunpack.c.l.b16 %v989
        %v1135 = vunpack.c.l.b16 %v990
        %v1136 = vunpack.c.l.b16 %v991
        %v1137 = vunpack.c.l.b16 %v992
        %v1138 = vunpack.c.l.b16 %v993
        %v1139 = vunpack.c.l.b16 %v994
        %v1140 = vunpack.c.l.b16 %v995
        %v1141 = vpack.c.b16 %v1134, %v1133
        %v1142 = vpack.c.b16 %v1136, %v1135
        %v1143 = vpack.c.b16 %v1138, %v1137
        %v1144 = vpack.c.b16 %v1140, %v1139
        %v1153 = vunpack.c.l.b16 %v997
        %v1154 = vunpack.c.l.b16 %v998
        %v1155 = vunpack.c.l.b16 %v999
        %v1156 = vunpack.c.l.b16 %v1000
        %v1157 = vunpack.c.l.b16 %v1001
        %v1158 = vunpack.c.l.b16 %v1002
        %v1159 = vunpack.c.l.b16 %v1003
        %v1160 = vunpack.c.l.b16 %v1004
        %v1161 = vpack.c.b16 %v1154, %v1153
        %v1162 = vpack.c.b16 %v1156, %v1155
        %v1163 = vpack.c.b16 %v1158, %v1157
        %v1164 = vpack.c.b16 %v1160, %v1159
        %1165 = vrot.lane.b32.xlu0 %v1161, 16
        %v1166 = vpop.permute.xlu0 %1165
        %1167 = vrot.lane.b32.xlu0 %v1162, 16
        %v1168 = vpop.permute.xlu0 %1167
        %1169 = vrot.lane.b32.xlu0 %v1163, 16
        %v1170 = vpop.permute.xlu0 %1169
        %1171 = vrot.lane.b32.xlu0 %v1164, 16
        %v1172 = vpop.permute.xlu0 %1171
        %v1173 = vunpack.c.l.b16 %v1026
        %v1174 = vunpack.c.l.b16 %v1040
        %v1175 = vunpack.c.l.b16 %v1054
        %v1176 = vunpack.c.l.b16 %v1068
        %v1177 = vunpack.c.l.b16 %v1082
        %v1178 = vunpack.c.l.b16 %v1096
        %v1179 = vunpack.c.l.b16 %v1110
        %v1180 = vunpack.c.l.b16 %v1124
        %v1181 = vpack.c.b16 %v1174, %v1173
        %v1182 = vpack.c.b16 %v1176, %v1175
        %v1183 = vpack.c.b16 %v1178, %v1177
        %v1184 = vpack.c.b16 %v1180, %v1179
        %1185 = vrot.lane.b32.xlu0 %v1181, 32
        %v1186 = vpop.permute.xlu0 %1185
        %1187 = vrot.lane.b32.xlu0 %v1182, 32
        %v1188 = vpop.permute.xlu0 %1187
        %1189 = vrot.lane.b32.xlu0 %v1183, 32
        %v1190 = vpop.permute.xlu0 %1189
        %1191 = vrot.lane.b32.xlu0 %v1184, 32
        %v1192 = vpop.permute.xlu0 %1191
        %v1195 = vsel %vm545, %v1141, %v1166
        %v1198 = vsel %vm545, %v1142, %v1168
        %v1201 = vsel %vm545, %v1143, %v1170
        %v1204 = vsel %vm545, %v1144, %v1172
        %v1206 = vsel %vm558, %v1195, %v1186
        %v1208 = vsel %vm558, %v1198, %v1188
        %v1210 = vsel %vm558, %v1201, %v1190
        %v1212 = vsel %vm558, %v1204, %v1192
        %s1213 = scalar_lea.vmem %s4, 48
        %v1214 = vld [vmem:[%s1213] sm:$0xf]
        %v1215 = vld [vmem:[%s1213 + $0x4] sm:$0xf]
        %v1216 = vld [vmem:[%s1213 + $0x8] sm:$0xf]
        %v1217 = vld [vmem:[%s1213 + $0xc] sm:$0xf]
        %v1218 = vld [vmem:[%s1213 + $0x10] sm:$0xf]
        %v1219 = vld [vmem:[%s1213 + $0x14] sm:$0xf]
        %v1226 = vunpack.c.l.b16 %v1214
        %v1227 = vunpack.c.l.b16 %v1215
        %v1228 = vunpack.c.l.b16 %v1216
        %v1229 = vunpack.c.l.b16 %v1217
        %v1230 = vunpack.c.l.b16 %v1218
        %v1231 = vunpack.c.l.b16 %v1219
        %v1232 = vpack.c.b16 %v1227, %v1226
        %v1233 = vpack.c.b16 %v1229, %v1228
        %v1234 = vpack.c.b16 %v1231, %v1230
        %v1238 = vsel %vm822, %v1206, 0
        %v1240 = vsel %vm822, %v1208, 0
        %v1242 = vsel %vm822, %v1210, 0
        %v1244 = vsel %vm822, %v1212, 0
        %1246 = vmatprep.subr.bf16.mxu0 0
        %1247 = vmatpush1.bf16.msra.mxu0 0
        %1248 = vmatprep.subr.bf16.mxu0 0
        %1249 = vmatpush1.bf16.msra.mxu0 0
        %1250 = vmatprep.subr.bf16.mxu0 0
        %1251 = vmatpush1.bf16.msra.mxu0 0
        %1252 = vmatprep.subr.bf16.mxu0 0
        %1253 = vmatpush1.bf16.msra.mxu0 0
        %1254 = vmatprep.subr.bf16.mxu0 0
        %1255 = vmatpush1.bf16.msra.mxu0 0
        %1256 = vmatprep.subr.bf16.mxu0 0
        %1257 = vmatpush1.bf16.msra.mxu0 %v1234
        %1258 = vmatprep.subr.bf16.mxu0 0
        %1259 = vmatpush1.bf16.msra.mxu0 %v1233
        %1260 = vmatprep.subr.bf16.mxu0 0
        %1261 = vmatpush1.bf16.msra.mxu0 %v1232
        %1262 = vmatprep.subr.bf16.mxu0 0
        %1263 = vmatpush2.bf16.msra.mxu0 0
        %1264 = vmatprep.subr.bf16.mxu0 0
        %1265 = vmatpush2.bf16.msra.mxu0 0
        %1266 = vmatprep.subr.bf16.mxu0 0
        %1267 = vmatpush2.bf16.msra.mxu0 0
        %1268 = vmatprep.subr.bf16.mxu0 0
        %1269 = vmatpush2.bf16.msra.mxu0 0
        %1270 = vmatprep.subr.bf16.mxu0 0
        %1271 = vmatpush2.bf16.msra.mxu0 0
        %1272 = vmatprep.subr.bf16.mxu0 0
        %1273 = vmatpush2.bf16.msra.mxu0 0
        %1274 = vmatprep.subr.bf16.mxu0 0
        %1275 = vmatpush2.bf16.msra.mxu0 0
        %1276 = vmatprep.subr.bf16.mxu0 0
        %1277 = vmatpush2.bf16.msra.mxu0 0
        %1278 = vmatprep.mubr.bf16.mxu0 0
        %1279 = vmatmul.mubr.bf16.gmra.mxu0 %v1238
        %v1280 = vpop.f32.mrf.mxu0
        %v1281 = vadd.f32 0.0, %v1280
        %v1282 = vpop.f32.mrf.mxu0
        %v1283 = vpop.f32.mrf.mxu0
        %v1284 = vadd.f32 0.0, %v1283
        %v1285 = vpop.f32.mrf.mxu0
        %1286 = vmatprep.mubr.bf16.mxu0 0
        %1287 = vmatmul.mubr.bf16.gmra.mxu0 %v1240
        %v1288 = vpop.f32.mrf.mxu0
        %v1289 = vadd.f32 0.0, %v1288
        %v1290 = vpop.f32.mrf.mxu0
        %v1291 = vpop.f32.mrf.mxu0
        %v1292 = vadd.f32 0.0, %v1291
        %v1293 = vpop.f32.mrf.mxu0
        %1294 = vmatprep.mubr.bf16.mxu0 0
        %1295 = vmatmul.mubr.bf16.gmra.mxu0 %v1242
        %v1296 = vpop.f32.mrf.mxu0
        %v1297 = vadd.f32 0.0, %v1296
        %v1298 = vpop.f32.mrf.mxu0
        %v1299 = vpop.f32.mrf.mxu0
        %v1300 = vadd.f32 0.0, %v1299
        %v1301 = vpop.f32.mrf.mxu0
        %1302 = vmatprep.mubr.bf16.mxu0 0
        %1303 = vmatmul.mubr.bf16.gmra.mxu0 %v1244
        %v1304 = vpop.f32.mrf.mxu0
        %v1305 = vadd.f32 0.0, %v1304
        %v1306 = vpop.f32.mrf.mxu0
        %v1307 = vpop.f32.mrf.mxu0
        %v1308 = vadd.f32 0.0, %v1307
        %v1309 = vpop.f32.mrf.mxu0
        %1310 = vdwg.mxu0
        %v1311 = vadd.f32 %v957, %v1281
        %v1312 = vadd.f32 %v960, %v1284
        %v1313 = vadd.f32 %v965, %v1289
        %v1314 = vadd.f32 %v968, %v1292
        %v1315 = vadd.f32 %v973, %v1297
        %v1316 = vadd.f32 %v976, %v1300
        %v1317 = vadd.f32 %v981, %v1305
        %v1318 = vadd.f32 %v984, %v1308
        %v1319 = vmax.f32 %v1311, 0.0
        %v1320 = vmax.f32 %v1312, 0.0
        %v1321 = vmax.f32 %v1313, 0.0
        %v1322 = vmax.f32 %v1314, 0.0
        %v1323 = vmax.f32 %v1315, 0.0
        %v1324 = vmax.f32 %v1316, 0.0
        %v1325 = vmax.f32 %v1317, 0.0
        %v1326 = vmax.f32 %v1318, 0.0
        %v1327 = vpack.c.bf16 %v1320, %v1319
        %v1328 = vpack.c.bf16 %v1322, %v1321
        %v1329 = vpack.c.bf16 %v1324, %v1323
        %v1330 = vpack.c.bf16 %v1326, %v1325
        %vm1331 = vcmask 257024
        %1332 = vst.msk [vmem:[#allocation2] sm:$0xf] %vm1331, 0
        %vm1333 = vcmask 253952
        %1334 = vst.msk [vmem:[#allocation2 + $0x4] sm:$0x1] %vm1333, 0
        %s1335 = scalar_lea.vmem [#allocation2], 72
        %1336 = vst.msk [vmem:[%s1335] sm:$0xf] %vm1331, 0
        %1337 = vst.msk [vmem:[%s1335 + $0x4] sm:$0x1] %vm1333, 0
        %vm1338 = vcmask 253952
        %vm1339 = vsmask.f32 256
        %vm1340 = vmand %vm1338, %vm1339
        %v1341 = vld [vmem:[#allocation2] sm:$0x1]
        %v1342 = vsel %vm1340, 0, %v1341
        %1343 = vst [vmem:[#allocation2] sm:$0x1] %v1342
        %v1344 = vld [vmem:[#allocation2 + $0x8] sm:$0x1]
        %v1345 = vsel %vm1340, 0, %v1344
        %1346 = vst [vmem:[#allocation2 + $0x8] sm:$0x1] %v1345
        %v1347 = vld [vmem:[#allocation2 + $0x10] sm:$0x1]
        %v1348 = vsel %vm1340, 0, %v1347
        %1349 = vst [vmem:[#allocation2 + $0x10] sm:$0x1] %v1348
        %v1350 = vld [vmem:[#allocation2 + $0x18] sm:$0x1]
        %v1351 = vsel %vm1340, 0, %v1350
        %1352 = vst [vmem:[#allocation2 + $0x18] sm:$0x1] %v1351
        %v1353 = vld [vmem:[#allocation2 + $0x20] sm:$0x1]
        %v1354 = vsel %vm1340, 0, %v1353
        %1355 = vst [vmem:[#allocation2 + $0x20] sm:$0x1] %v1354
        %v1356 = vld [vmem:[#allocation2 + $0x28] sm:$0x1]
        %v1357 = vsel %vm1340, 0, %v1356
        %1358 = vst [vmem:[#allocation2 + $0x28] sm:$0x1] %v1357
        %v1359 = vld [vmem:[#allocation2 + $0x30] sm:$0x1]
        %v1360 = vsel %vm1340, 0, %v1359
        %1361 = vst [vmem:[#allocation2 + $0x30] sm:$0x1] %v1360
        %v1362 = vld [vmem:[#allocation2 + $0x38] sm:$0x1]
        %v1363 = vsel %vm1340, 0, %v1362
        %1364 = vst [vmem:[#allocation2 + $0x38] sm:$0x1] %v1363
        %v1365 = vld [vmem:[#allocation2 + $0x40] sm:$0x1]
        %v1366 = vsel %vm1340, 0, %v1365
        %1367 = vst [vmem:[#allocation2 + $0x40] sm:$0x1] %v1366
        %v1368 = vld [vmem:[#allocation2 + $0x48] sm:$0x1]
        %v1369 = vsel %vm1340, 0, %v1368
        %1370 = vst [vmem:[#allocation2 + $0x48] sm:$0x1] %v1369
        %vm1371 = vsmask.f32 7938
        %vm1372 = vmand %vm1338, %vm1371
        %v1373 = vld [vmem:[#allocation2 + $0x4] sm:$0x1]
        %v1374 = vsel %vm1372, 0, %v1373
        %1375 = vst [vmem:[#allocation2 + $0x4] sm:$0x1] %v1374
        %v1376 = vld [vmem:[#allocation2 + $0xc] sm:$0x1]
        %v1377 = vsel %vm1372, 0, %v1376
        %1378 = vst [vmem:[#allocation2 + $0xc] sm:$0x1] %v1377
        %v1379 = vld [vmem:[#allocation2 + $0x14] sm:$0x1]
        %v1380 = vsel %vm1372, 0, %v1379
        %1381 = vst [vmem:[#allocation2 + $0x14] sm:$0x1] %v1380
        %v1382 = vld [vmem:[#allocation2 + $0x1c] sm:$0x1]
        %v1383 = vsel %vm1372, 0, %v1382
        %1384 = vst [vmem:[#allocation2 + $0x1c] sm:$0x1] %v1383
        %v1385 = vld [vmem:[#allocation2 + $0x24] sm:$0x1]
        %v1386 = vsel %vm1372, 0, %v1385
        %1387 = vst [vmem:[#allocation2 + $0x24] sm:$0x1] %v1386
        %v1388 = vld [vmem:[#allocation2 + $0x2c] sm:$0x1]
        %v1389 = vsel %vm1372, 0, %v1388
        %1390 = vst [vmem:[#allocation2 + $0x2c] sm:$0x1] %v1389
        %v1391 = vld [vmem:[#allocation2 + $0x34] sm:$0x1]
        %v1392 = vsel %vm1372, 0, %v1391
        %1393 = vst [vmem:[#allocation2 + $0x34] sm:$0x1] %v1392
        %v1394 = vld [vmem:[#allocation2 + $0x3c] sm:$0x1]
        %v1395 = vsel %vm1372, 0, %v1394
        %1396 = vst [vmem:[#allocation2 + $0x3c] sm:$0x1] %v1395
        %v1397 = vld [vmem:[#allocation2 + $0x44] sm:$0x1]
        %v1398 = vsel %vm1372, 0, %v1397
        %1399 = vst [vmem:[#allocation2 + $0x44] sm:$0x1] %v1398
        %v1400 = vld [vmem:[#allocation2 + $0x4c] sm:$0x1]
        %v1401 = vsel %vm1372, 0, %v1400
        %1402 = vst [vmem:[#allocation2 + $0x4c] sm:$0x1] %v1401
        %v1407 = vunpack.c.l.b16 %v1327
        %v1408 = vunpack.c.h.b16 %v1327
        %v1409 = vunpack.c.l.b16 %v1328
        %v1410 = vunpack.c.h.b16 %v1328
        %v1411 = vunpack.c.l.b16 %v1329
        %v1412 = vunpack.c.h.b16 %v1329
        %v1413 = vunpack.c.l.b16 %v1330
        %v1414 = vunpack.c.h.b16 %v1330
        %v1415 = vpack.c.b16 %v1407, %v1407
        %v1416 = vpack.c.b16 %v1408, %v1408
        %v1417 = vpack.c.b16 %v1409, %v1409
        %v1418 = vpack.c.b16 %v1410, %v1410
        %v1419 = vpack.c.b16 %v1411, %v1411
        %v1420 = vpack.c.b16 %v1412, %v1412
        %v1421 = vpack.c.b16 %v1413, %v1413
        %v1422 = vpack.c.b16 %v1414, %v1414
        %v1424 = vshrl.u32 %v1415, 16
        %v1426 = vrot.slane %v1424, 7
        %v1427 = vshll.u32 %v1415, 16
        %v1429 = vor.u32 %v1426, %v1427
        %v1430 = vrot.slane %v1426, 4
        %v1432 = vshrl.u32 %v1416, 16
        %v1434 = vrot.slane %v1432, 7
        %v1435 = vshll.u32 %v1416, 16
        %v1437 = vor.u32 %v1434, %v1435
        %v1438 = vrot.slane %v1434, 4
        %v1440 = vshrl.u32 %v1417, 16
        %v1442 = vrot.slane %v1440, 7
        %v1443 = vshll.u32 %v1417, 16
        %v1445 = vor.u32 %v1442, %v1443
        %v1446 = vrot.slane %v1442, 4
        %v1448 = vshrl.u32 %v1418, 16
        %v1450 = vrot.slane %v1448, 7
        %v1451 = vshll.u32 %v1418, 16
        %v1453 = vor.u32 %v1450, %v1451
        %v1454 = vrot.slane %v1450, 4
        %v1456 = vshrl.u32 %v1419, 16
        %v1458 = vrot.slane %v1456, 7
        %v1459 = vshll.u32 %v1419, 16
        %v1461 = vor.u32 %v1458, %v1459
        %v1462 = vrot.slane %v1458, 4
        %v1464 = vshrl.u32 %v1420, 16
        %v1466 = vrot.slane %v1464, 7
        %v1467 = vshll.u32 %v1420, 16
        %v1469 = vor.u32 %v1466, %v1467
        %v1470 = vrot.slane %v1466, 4
        %v1472 = vshrl.u32 %v1421, 16
        %v1474 = vrot.slane %v1472, 7
        %v1475 = vshll.u32 %v1421, 16
        %v1477 = vor.u32 %v1474, %v1475
        %v1478 = vrot.slane %v1474, 4
        %v1480 = vshrl.u32 %v1422, 16
        %v1482 = vrot.slane %v1480, 7
        %v1483 = vshll.u32 %v1422, 16
        %v1485 = vor.u32 %v1482, %v1483
        %v1486 = vrot.slane %v1482, 4
        %s1503 = scalar_lea.vmem [#allocation2], 8
        %vm1504 = vcmask 257024
        %vm1505 = vmand %vm1504, %vm1371
        %v1506 = vld [vmem:[%s1503] sm:$0xf]
        %v1507 = vsel %vm1505, %v1429, %v1506
        %1508 = vst [vmem:[%s1503] sm:$0xf] %v1507
        %v1509 = vld [vmem:[%s1503 + $0x4] sm:$0x1]
        %v1510 = vsel %vm1340, %v1430, %v1509
        %1511 = vst [vmem:[%s1503 + $0x4] sm:$0x1] %v1510
        %v1512 = vld [vmem:[%s1503 + $0x8] sm:$0xf]
        %v1513 = vsel %vm1505, %v1437, %v1512
        %1514 = vst [vmem:[%s1503 + $0x8] sm:$0xf] %v1513
        %v1515 = vld [vmem:[%s1503 + $0xc] sm:$0x1]
        %v1516 = vsel %vm1340, %v1438, %v1515
        %1517 = vst [vmem:[%s1503 + $0xc] sm:$0x1] %v1516
        %v1518 = vld [vmem:[%s1503 + $0x10] sm:$0xf]
        %v1519 = vsel %vm1505, %v1445, %v1518
        %1520 = vst [vmem:[%s1503 + $0x10] sm:$0xf] %v1519
        %v1521 = vld [vmem:[%s1503 + $0x14] sm:$0x1]
        %v1522 = vsel %vm1340, %v1446, %v1521
        %1523 = vst [vmem:[%s1503 + $0x14] sm:$0x1] %v1522
        %v1524 = vld [vmem:[%s1503 + $0x18] sm:$0xf]
        %v1525 = vsel %vm1505, %v1453, %v1524
        %1526 = vst [vmem:[%s1503 + $0x18] sm:$0xf] %v1525
        %v1527 = vld [vmem:[%s1503 + $0x1c] sm:$0x1]
        %v1528 = vsel %vm1340, %v1454, %v1527
        %1529 = vst [vmem:[%s1503 + $0x1c] sm:$0x1] %v1528
        %v1530 = vld [vmem:[%s1503 + $0x20] sm:$0xf]
        %v1531 = vsel %vm1505, %v1461, %v1530
        %1532 = vst [vmem:[%s1503 + $0x20] sm:$0xf] %v1531
        %v1533 = vld [vmem:[%s1503 + $0x24] sm:$0x1]
        %v1534 = vsel %vm1340, %v1462, %v1533
        %1535 = vst [vmem:[%s1503 + $0x24] sm:$0x1] %v1534
        %v1536 = vld [vmem:[%s1503 + $0x28] sm:$0xf]
        %v1537 = vsel %vm1505, %v1469, %v1536
        %1538 = vst [vmem:[%s1503 + $0x28] sm:$0xf] %v1537
        %v1539 = vld [vmem:[%s1503 + $0x2c] sm:$0x1]
        %v1540 = vsel %vm1340, %v1470, %v1539
        %1541 = vst [vmem:[%s1503 + $0x2c] sm:$0x1] %v1540
        %v1542 = vld [vmem:[%s1503 + $0x30] sm:$0xf]
        %v1543 = vsel %vm1505, %v1477, %v1542
        %1544 = vst [vmem:[%s1503 + $0x30] sm:$0xf] %v1543
        %v1545 = vld [vmem:[%s1503 + $0x34] sm:$0x1]
        %v1546 = vsel %vm1340, %v1478, %v1545
        %1547 = vst [vmem:[%s1503 + $0x34] sm:$0x1] %v1546
        %v1548 = vld [vmem:[%s1503 + $0x38] sm:$0xf]
        %v1549 = vsel %vm1505, %v1485, %v1548
        %1550 = vst [vmem:[%s1503 + $0x38] sm:$0xf] %v1549
        %v1551 = vld [vmem:[%s1503 + $0x3c] sm:$0x1]
        %v1552 = vsel %vm1340, %v1486, %v1551
        %1553 = vst [vmem:[%s1503 + $0x3c] sm:$0x1] %v1552
        %v1554 = vld [vmem:[#allocation2] sm:$0xf]
        %v1555 = vld [vmem:[#allocation2 + $0x8] sm:$0xf]
        %v1556 = vld [vmem:[#allocation2 + $0x10] sm:$0xf]
        %v1557 = vld [vmem:[#allocation2 + $0x18] sm:$0xf]
        %v1558 = vld [vmem:[#allocation2 + $0x20] sm:$0xf]
        %v1559 = vld [vmem:[#allocation2 + $0x28] sm:$0xf]
        %v1560 = vld [vmem:[#allocation2 + $0x30] sm:$0xf]
        %v1561 = vld [vmem:[#allocation2 + $0x38] sm:$0xf]
        %v1562 = vld [vmem:[#allocation2 + $0x4] sm:$0x1]
        %v1563 = vld [vmem:[#allocation2 + $0xc] sm:$0x1]
        %v1564 = vld [vmem:[#allocation2 + $0x14] sm:$0x1]
        %v1565 = vld [vmem:[#allocation2 + $0x1c] sm:$0x1]
        %v1566 = vld [vmem:[#allocation2 + $0x24] sm:$0x1]
        %v1567 = vld [vmem:[#allocation2 + $0x2c] sm:$0x1]
        %v1568 = vld [vmem:[#allocation2 + $0x34] sm:$0x1]
        %v1569 = vld [vmem:[#allocation2 + $0x3c] sm:$0x1]
        %v1571 = vshrl.u32 %v1554, 16
        %v1573 = vrot.slane %v1571, 4
        %v1574 = vshll.u32 %v1554, 16
        %v1576 = vrot.slane %v1574, 5
        %v1577 = vor.u32 %v1573, %v1576
        %v1578 = vrot.slane %v1577, 4
        %v1580 = vshll.u32 %v1562, 16
        %v1582 = vrot.slane %v1580, 5
        %v1583 = vsel %vm364, %v1578, %v1582
        %v1585 = vshrl.u32 %v1555, 16
        %v1587 = vrot.slane %v1585, 4
        %v1588 = vshll.u32 %v1555, 16
        %v1590 = vrot.slane %v1588, 5
        %v1591 = vor.u32 %v1587, %v1590
        %v1592 = vrot.slane %v1591, 4
        %v1594 = vshll.u32 %v1563, 16
        %v1596 = vrot.slane %v1594, 5
        %v1597 = vsel %vm364, %v1592, %v1596
        %v1599 = vshrl.u32 %v1556, 16
        %v1601 = vrot.slane %v1599, 4
        %v1602 = vshll.u32 %v1556, 16
        %v1604 = vrot.slane %v1602, 5
        %v1605 = vor.u32 %v1601, %v1604
        %v1606 = vrot.slane %v1605, 4
        %v1608 = vshll.u32 %v1564, 16
        %v1610 = vrot.slane %v1608, 5
        %v1611 = vsel %vm364, %v1606, %v1610
        %v1613 = vshrl.u32 %v1557, 16
        %v1615 = vrot.slane %v1613, 4
        %v1616 = vshll.u32 %v1557, 16
        %v1618 = vrot.slane %v1616, 5
        %v1619 = vor.u32 %v1615, %v1618
        %v1620 = vrot.slane %v1619, 4
        %v1622 = vshll.u32 %v1565, 16
        %v1624 = vrot.slane %v1622, 5
        %v1625 = vsel %vm364, %v1620, %v1624
        %v1627 = vshrl.u32 %v1558, 16
        %v1629 = vrot.slane %v1627, 4
        %v1630 = vshll.u32 %v1558, 16
        %v1632 = vrot.slane %v1630, 5
        %v1633 = vor.u32 %v1629, %v1632
        %v1634 = vrot.slane %v1633, 4
        %v1636 = vshll.u32 %v1566, 16
        %v1638 = vrot.slane %v1636, 5
        %v1639 = vsel %vm364, %v1634, %v1638
        %v1641 = vshrl.u32 %v1559, 16
        %v1643 = vrot.slane %v1641, 4
        %v1644 = vshll.u32 %v1559, 16
        %v1646 = vrot.slane %v1644, 5
        %v1647 = vor.u32 %v1643, %v1646
        %v1648 = vrot.slane %v1647, 4
        %v1650 = vshll.u32 %v1567, 16
        %v1652 = vrot.slane %v1650, 5
        %v1653 = vsel %vm364, %v1648, %v1652
        %v1655 = vshrl.u32 %v1560, 16
        %v1657 = vrot.slane %v1655, 4
        %v1658 = vshll.u32 %v1560, 16
        %v1660 = vrot.slane %v1658, 5
        %v1661 = vor.u32 %v1657, %v1660
        %v1662 = vrot.slane %v1661, 4
        %v1664 = vshll.u32 %v1568, 16
        %v1666 = vrot.slane %v1664, 5
        %v1667 = vsel %vm364, %v1662, %v1666
        %v1669 = vshrl.u32 %v1561, 16
        %v1671 = vrot.slane %v1669, 4
        %v1672 = vshll.u32 %v1561, 16
        %v1674 = vrot.slane %v1672, 5
        %v1675 = vor.u32 %v1671, %v1674
        %v1676 = vrot.slane %v1675, 4
        %v1678 = vshll.u32 %v1569, 16
        %v1680 = vrot.slane %v1678, 5
        %v1681 = vsel %vm364, %v1676, %v1680
        %v1682 = vld [vmem:[#allocation2] sm:$0xe]
        %v1683 = vld [vmem:[#allocation2 + $0x8] sm:$0xe]
        %v1684 = vld [vmem:[#allocation2 + $0x10] sm:$0xe]
        %v1685 = vld [vmem:[#allocation2 + $0x18] sm:$0xe]
        %v1686 = vld [vmem:[#allocation2 + $0x20] sm:$0xe]
        %v1687 = vld [vmem:[#allocation2 + $0x28] sm:$0xe]
        %v1688 = vld [vmem:[#allocation2 + $0x30] sm:$0xe]
        %v1689 = vld [vmem:[#allocation2 + $0x38] sm:$0xe]
        %vm1706 = vcmask 1042432
        %vm1707 = vcmask 1046532
        %vm1708 = vmor %vm1706, %vm1707
        %v1709 = vrot.slane %v1682, 5
        %v1710 = vrot.slane %v1709, 4
        %v1711 = vrot.slane %v1562, 5
        %v1712 = vsel %vm1708, %v1710, %v1711
        %v1713 = vrot.slane %v1683, 5
        %v1714 = vrot.slane %v1713, 4
        %v1715 = vrot.slane %v1563, 5
        %v1716 = vsel %vm1708, %v1714, %v1715
        %v1717 = vrot.slane %v1684, 5
        %v1718 = vrot.slane %v1717, 4
        %v1719 = vrot.slane %v1564, 5
        %v1720 = vsel %vm1708, %v1718, %v1719
        %v1721 = vrot.slane %v1685, 5
        %v1722 = vrot.slane %v1721, 4
        %v1723 = vrot.slane %v1565, 5
        %v1724 = vsel %vm1708, %v1722, %v1723
        %v1725 = vrot.slane %v1686, 5
        %v1726 = vrot.slane %v1725, 4
        %v1727 = vrot.slane %v1566, 5
        %v1728 = vsel %vm1708, %v1726, %v1727
        %v1729 = vrot.slane %v1687, 5
        %v1730 = vrot.slane %v1729, 4
        %v1731 = vrot.slane %v1567, 5
        %v1732 = vsel %vm1708, %v1730, %v1731
        %v1733 = vrot.slane %v1688, 5
        %v1734 = vrot.slane %v1733, 4
        %v1735 = vrot.slane %v1568, 5
        %v1736 = vsel %vm1708, %v1734, %v1735
        %v1737 = vrot.slane %v1689, 5
        %v1738 = vrot.slane %v1737, 4
        %v1739 = vrot.slane %v1569, 5
        %v1740 = vsel %vm1708, %v1738, %v1739
        %v1749 = vunpack.c.l.b16 %v1554
        %v1750 = vunpack.c.l.b16 %v1555
        %v1751 = vunpack.c.l.b16 %v1556
        %v1752 = vunpack.c.l.b16 %v1557
        %v1753 = vunpack.c.l.b16 %v1558
        %v1754 = vunpack.c.l.b16 %v1559
        %v1755 = vunpack.c.l.b16 %v1560
        %v1756 = vunpack.c.l.b16 %v1561
        %v1757 = vpack.c.b16 %v1750, %v1749
        %v1758 = vpack.c.b16 %v1752, %v1751
        %v1759 = vpack.c.b16 %v1754, %v1753
        %v1760 = vpack.c.b16 %v1756, %v1755
        %v1761 = vunpack.c.l.b16 %v1583
        %v1762 = vunpack.c.l.b16 %v1597
        %v1763 = vunpack.c.l.b16 %v1611
        %v1764 = vunpack.c.l.b16 %v1625
        %v1765 = vunpack.c.l.b16 %v1639
        %v1766 = vunpack.c.l.b16 %v1653
        %v1767 = vunpack.c.l.b16 %v1667
        %v1768 = vunpack.c.l.b16 %v1681
        %v1769 = vpack.c.b16 %v1762, %v1761
        %v1770 = vpack.c.b16 %v1764, %v1763
        %v1771 = vpack.c.b16 %v1766, %v1765
        %v1772 = vpack.c.b16 %v1768, %v1767
        %1773 = vrot.lane.b32.xlu0 %v1769, 32
        %v1774 = vpop.permute.xlu0 %1773
        %1775 = vrot.lane.b32.xlu0 %v1770, 32
        %v1776 = vpop.permute.xlu0 %1775
        %1777 = vrot.lane.b32.xlu0 %v1771, 32
        %v1778 = vpop.permute.xlu0 %1777
        %1779 = vrot.lane.b32.xlu0 %v1772, 32
        %v1780 = vpop.permute.xlu0 %1779
        %v1781 = vunpack.c.l.b16 %v1712
        %v1782 = vunpack.c.l.b16 %v1716
        %v1783 = vunpack.c.l.b16 %v1720
        %v1784 = vunpack.c.l.b16 %v1724
        %v1785 = vunpack.c.l.b16 %v1728
        %v1786 = vunpack.c.l.b16 %v1732
        %v1787 = vunpack.c.l.b16 %v1736
        %v1788 = vunpack.c.l.b16 %v1740
        %v1789 = vpack.c.b16 %v1782, %v1781
        %v1790 = vpack.c.b16 %v1784, %v1783
        %v1791 = vpack.c.b16 %v1786, %v1785
        %v1792 = vpack.c.b16 %v1788, %v1787
        %1793 = vrot.lane.b32.xlu0 %v1789, 64
        %v1794 = vpop.permute.xlu0 %1793
        %1795 = vrot.lane.b32.xlu0 %v1790, 64
        %v1796 = vpop.permute.xlu0 %1795
        %1797 = vrot.lane.b32.xlu0 %v1791, 64
        %v1798 = vpop.permute.xlu0 %1797
        %1799 = vrot.lane.b32.xlu0 %v1792, 64
        %v1800 = vpop.permute.xlu0 %1799
        %v1803 = vsel %vm558, %v1757, %v1774
        %v1806 = vsel %vm558, %v1758, %v1776
        %v1809 = vsel %vm558, %v1759, %v1778
        %v1812 = vsel %vm558, %v1760, %v1780
        %vm1813 = vcmask 523264
        %v1815 = vsel %vm1813, %v1803, %v1794
        %v1817 = vsel %vm1813, %v1806, %v1796
        %v1819 = vsel %vm1813, %v1809, %v1798
        %v1821 = vsel %vm1813, %v1812, %v1800
        %v1822 = vld [vmem:[%s5] sm:$0xf]
        %v1823 = vld [vmem:[%s5 + $0x4] sm:$0xf]
        %v1824 = vld [vmem:[%s5 + $0x8] sm:$0xf]
        %v1825 = vld [vmem:[%s5 + $0xc] sm:$0xf]
        %v1826 = vld [vmem:[%s5 + $0x10] sm:$0xf]
        %v1827 = vld [vmem:[%s5 + $0x14] sm:$0xf]
        %v1828 = vld [vmem:[%s5 + $0x18] sm:$0xf]
        %v1829 = vld [vmem:[%s5 + $0x1c] sm:$0xf]
        %v1830 = vld [vmem:[%s5 + $0x20] sm:$0xf]
        %v1831 = vld [vmem:[%s5 + $0x24] sm:$0xf]
        %v1832 = vld [vmem:[%s5 + $0x28] sm:$0xf]
        %v1833 = vld [vmem:[%s5 + $0x2c] sm:$0xf]
        %v1834 = vld [vmem:[%s1503] sm:$0xf]
        %v1835 = vld [vmem:[%s1503 + $0x8] sm:$0xf]
        %v1836 = vld [vmem:[%s1503 + $0x10] sm:$0xf]
        %v1837 = vld [vmem:[%s1503 + $0x18] sm:$0xf]
        %v1838 = vld [vmem:[%s1503 + $0x20] sm:$0xf]
        %v1839 = vld [vmem:[%s1503 + $0x28] sm:$0xf]
        %v1840 = vld [vmem:[%s1503 + $0x30] sm:$0xf]
        %v1841 = vld [vmem:[%s1503 + $0x38] sm:$0xf]
        %v1842 = vld [vmem:[%s1503 + $0x4] sm:$0x1]
        %v1843 = vld [vmem:[%s1503 + $0xc] sm:$0x1]
        %v1844 = vld [vmem:[%s1503 + $0x14] sm:$0x1]
        %v1845 = vld [vmem:[%s1503 + $0x1c] sm:$0x1]
        %v1846 = vld [vmem:[%s1503 + $0x24] sm:$0x1]
        %v1847 = vld [vmem:[%s1503 + $0x2c] sm:$0x1]
        %v1848 = vld [vmem:[%s1503 + $0x34] sm:$0x1]
        %v1849 = vld [vmem:[%s1503 + $0x3c] sm:$0x1]
        %v1851 = vshrl.u32 %v1834, 16
        %v1853 = vrot.slane %v1851, 4
        %v1854 = vshll.u32 %v1834, 16
        %v1856 = vrot.slane %v1854, 5
        %v1857 = vor.u32 %v1853, %v1856
        %v1858 = vrot.slane %v1857, 4
        %v1860 = vshll.u32 %v1842, 16
        %v1862 = vrot.slane %v1860, 5
        %v1863 = vsel %vm364, %v1858, %v1862
        %v1865 = vshrl.u32 %v1835, 16
        %v1867 = vrot.slane %v1865, 4
        %v1868 = vshll.u32 %v1835, 16
        %v1870 = vrot.slane %v1868, 5
        %v1871 = vor.u32 %v1867, %v1870
        %v1872 = vrot.slane %v1871, 4
        %v1874 = vshll.u32 %v1843, 16
        %v1876 = vrot.slane %v1874, 5
        %v1877 = vsel %vm364, %v1872, %v1876
        %v1879 = vshrl.u32 %v1836, 16
        %v1881 = vrot.slane %v1879, 4
        %v1882 = vshll.u32 %v1836, 16
        %v1884 = vrot.slane %v1882, 5
        %v1885 = vor.u32 %v1881, %v1884
        %v1886 = vrot.slane %v1885, 4
        %v1888 = vshll.u32 %v1844, 16
        %v1890 = vrot.slane %v1888, 5
        %v1891 = vsel %vm364, %v1886, %v1890
        %v1893 = vshrl.u32 %v1837, 16
        %v1895 = vrot.slane %v1893, 4
        %v1896 = vshll.u32 %v1837, 16
        %v1898 = vrot.slane %v1896, 5
        %v1899 = vor.u32 %v1895, %v1898
        %v1900 = vrot.slane %v1899, 4
        %v1902 = vshll.u32 %v1845, 16
        %v1904 = vrot.slane %v1902, 5
        %v1905 = vsel %vm364, %v1900, %v1904
        %v1907 = vshrl.u32 %v1838, 16
        %v1909 = vrot.slane %v1907, 4
        %v1910 = vshll.u32 %v1838, 16
        %v1912 = vrot.slane %v1910, 5
        %v1913 = vor.u32 %v1909, %v1912
        %v1914 = vrot.slane %v1913, 4
        %v1916 = vshll.u32 %v1846, 16
        %v1918 = vrot.slane %v1916, 5
        %v1919 = vsel %vm364, %v1914, %v1918
        %v1921 = vshrl.u32 %v1839, 16
        %v1923 = vrot.slane %v1921, 4
        %v1924 = vshll.u32 %v1839, 16
        %v1926 = vrot.slane %v1924, 5
        %v1927 = vor.u32 %v1923, %v1926
        %v1928 = vrot.slane %v1927, 4
        %v1930 = vshll.u32 %v1847, 16
        %v1932 = vrot.slane %v1930, 5
        %v1933 = vsel %vm364, %v1928, %v1932
        %v1935 = vshrl.u32 %v1840, 16
        %v1937 = vrot.slane %v1935, 4
        %v1938 = vshll.u32 %v1840, 16
        %v1940 = vrot.slane %v1938, 5
        %v1941 = vor.u32 %v1937, %v1940
        %v1942 = vrot.slane %v1941, 4
        %v1944 = vshll.u32 %v1848, 16
        %v1946 = vrot.slane %v1944, 5
        %v1947 = vsel %vm364, %v1942, %v1946
        %v1949 = vshrl.u32 %v1841, 16
        %v1951 = vrot.slane %v1949, 4
        %v1952 = vshll.u32 %v1841, 16
        %v1954 = vrot.slane %v1952, 5
        %v1955 = vor.u32 %v1951, %v1954
        %v1956 = vrot.slane %v1955, 4
        %v1958 = vshll.u32 %v1849, 16
        %v1960 = vrot.slane %v1958, 5
        %v1961 = vsel %vm364, %v1956, %v1960
        %v1962 = vld [vmem:[%s1503] sm:$0xe]
        %v1963 = vld [vmem:[%s1503 + $0x8] sm:$0xe]
        %v1964 = vld [vmem:[%s1503 + $0x10] sm:$0xe]
        %v1965 = vld [vmem:[%s1503 + $0x18] sm:$0xe]
        %v1966 = vld [vmem:[%s1503 + $0x20] sm:$0xe]
        %v1967 = vld [vmem:[%s1503 + $0x28] sm:$0xe]
        %v1968 = vld [vmem:[%s1503 + $0x30] sm:$0xe]
        %v1969 = vld [vmem:[%s1503 + $0x38] sm:$0xe]
        %v1986 = vrot.slane %v1962, 5
        %v1987 = vrot.slane %v1986, 4
        %v1988 = vrot.slane %v1842, 5
        %v1989 = vsel %vm1708, %v1987, %v1988
        %v1990 = vrot.slane %v1963, 5
        %v1991 = vrot.slane %v1990, 4
        %v1992 = vrot.slane %v1843, 5
        %v1993 = vsel %vm1708, %v1991, %v1992
        %v1994 = vrot.slane %v1964, 5
        %v1995 = vrot.slane %v1994, 4
        %v1996 = vrot.slane %v1844, 5
        %v1997 = vsel %vm1708, %v1995, %v1996
        %v1998 = vrot.slane %v1965, 5
        %v1999 = vrot.slane %v1998, 4
        %v2000 = vrot.slane %v1845, 5
        %v2001 = vsel %vm1708, %v1999, %v2000
        %v2002 = vrot.slane %v1966, 5
        %v2003 = vrot.slane %v2002, 4
        %v2004 = vrot.slane %v1846, 5
        %v2005 = vsel %vm1708, %v2003, %v2004
        %v2006 = vrot.slane %v1967, 5
        %v2007 = vrot.slane %v2006, 4
        %v2008 = vrot.slane %v1847, 5
        %v2009 = vsel %vm1708, %v2007, %v2008
        %v2010 = vrot.slane %v1968, 5
        %v2011 = vrot.slane %v2010, 4
        %v2012 = vrot.slane %v1848, 5
        %v2013 = vsel %vm1708, %v2011, %v2012
        %v2014 = vrot.slane %v1969, 5
        %v2015 = vrot.slane %v2014, 4
        %v2016 = vrot.slane %v1849, 5
        %v2017 = vsel %vm1708, %v2015, %v2016
        %v2026 = vunpack.c.l.b16 %v1834
        %v2027 = vunpack.c.l.b16 %v1835
        %v2028 = vunpack.c.l.b16 %v1836
        %v2029 = vunpack.c.l.b16 %v1837
        %v2030 = vunpack.c.l.b16 %v1838
        %v2031 = vunpack.c.l.b16 %v1839
        %v2032 = vunpack.c.l.b16 %v1840
        %v2033 = vunpack.c.l.b16 %v1841
        %v2034 = vpack.c.b16 %v2027, %v2026
        %v2035 = vpack.c.b16 %v2029, %v2028
        %v2036 = vpack.c.b16 %v2031, %v2030
        %v2037 = vpack.c.b16 %v2033, %v2032
        %v2038 = vunpack.c.l.b16 %v1863
        %v2039 = vunpack.c.l.b16 %v1877
        %v2040 = vunpack.c.l.b16 %v1891
        %v2041 = vunpack.c.l.b16 %v1905
        %v2042 = vunpack.c.l.b16 %v1919
        %v2043 = vunpack.c.l.b16 %v1933
        %v2044 = vunpack.c.l.b16 %v1947
        %v2045 = vunpack.c.l.b16 %v1961
        %v2046 = vpack.c.b16 %v2039, %v2038
        %v2047 = vpack.c.b16 %v2041, %v2040
        %v2048 = vpack.c.b16 %v2043, %v2042
        %v2049 = vpack.c.b16 %v2045, %v2044
        %2050 = vrot.lane.b32.xlu0 %v2046, 32
        %v2051 = vpop.permute.xlu0 %2050
        %2052 = vrot.lane.b32.xlu0 %v2047, 32
        %v2053 = vpop.permute.xlu0 %2052
        %2054 = vrot.lane.b32.xlu0 %v2048, 32
        %v2055 = vpop.permute.xlu0 %2054
        %2056 = vrot.lane.b32.xlu0 %v2049, 32
        %v2057 = vpop.permute.xlu0 %2056
        %v2058 = vunpack.c.l.b16 %v1989
        %v2059 = vunpack.c.l.b16 %v1993
        %v2060 = vunpack.c.l.b16 %v1997
        %v2061 = vunpack.c.l.b16 %v2001
        %v2062 = vunpack.c.l.b16 %v2005
        %v2063 = vunpack.c.l.b16 %v2009
        %v2064 = vunpack.c.l.b16 %v2013
        %v2065 = vunpack.c.l.b16 %v2017
        %v2066 = vpack.c.b16 %v2059, %v2058
        %v2067 = vpack.c.b16 %v2061, %v2060
        %v2068 = vpack.c.b16 %v2063, %v2062
        %v2069 = vpack.c.b16 %v2065, %v2064
        %2070 = vrot.lane.b32.xlu0 %v2066, 64
        %v2071 = vpop.permute.xlu0 %2070
        %2072 = vrot.lane.b32.xlu0 %v2067, 64
        %v2073 = vpop.permute.xlu0 %2072
        %2074 = vrot.lane.b32.xlu0 %v2068, 64
        %v2075 = vpop.permute.xlu0 %2074
        %2076 = vrot.lane.b32.xlu0 %v2069, 64
        %v2077 = vpop.permute.xlu0 %2076
        %v2080 = vsel %vm558, %v2034, %v2051
        %v2083 = vsel %vm558, %v2035, %v2053
        %v2086 = vsel %vm558, %v2036, %v2055
        %v2089 = vsel %vm558, %v2037, %v2057
        %v2091 = vsel %vm1813, %v2080, %v2071
        %v2093 = vsel %vm1813, %v2083, %v2073
        %v2095 = vsel %vm1813, %v2086, %v2075
        %v2097 = vsel %vm1813, %v2089, %v2077
        %s2098 = scalar_lea.vmem %s5, 48
        %v2099 = vld [vmem:[%s2098] sm:$0xf]
        %v2100 = vld [vmem:[%s2098 + $0x4] sm:$0xf]
        %v2101 = vld [vmem:[%s2098 + $0x8] sm:$0xf]
        %v2102 = vld [vmem:[%s2098 + $0xc] sm:$0xf]
        %v2103 = vld [vmem:[%s2098 + $0x10] sm:$0xf]
        %v2104 = vld [vmem:[%s2098 + $0x14] sm:$0xf]
        %v2105 = vld [vmem:[%s2098 + $0x18] sm:$0xf]
        %v2106 = vld [vmem:[%s2098 + $0x1c] sm:$0xf]
        %v2107 = vld [vmem:[%s2098 + $0x20] sm:$0xf]
        %v2108 = vld [vmem:[%s2098 + $0x24] sm:$0xf]
        %v2109 = vld [vmem:[%s2098 + $0x28] sm:$0xf]
        %v2110 = vld [vmem:[%s2098 + $0x2c] sm:$0xf]
        %v2123 = vunpack.c.l.b16 %v2099
        %v2124 = vunpack.c.l.b16 %v2100
        %v2125 = vunpack.c.l.b16 %v2101
        %v2126 = vunpack.c.l.b16 %v2102
        %v2127 = vunpack.c.l.b16 %v2103
        %v2128 = vunpack.c.l.b16 %v2104
        %v2129 = vunpack.c.l.b16 %v2105
        %v2130 = vunpack.c.l.b16 %v2106
        %v2131 = vunpack.c.l.b16 %v2107
        %v2132 = vunpack.c.l.b16 %v2108
        %v2133 = vunpack.c.l.b16 %v2109
        %v2134 = vunpack.c.l.b16 %v2110
        %v2135 = vpack.c.b16 %v2124, %v2123
        %v2136 = vpack.c.b16 %v2126, %v2125
        %v2137 = vpack.c.b16 %v2128, %v2127
        %v2138 = vpack.c.b16 %v2130, %v2129
        %v2139 = vpack.c.b16 %v2132, %v2131
        %v2140 = vpack.c.b16 %v2134, %v2133
        %vm2147 = vcmask 785408
        %v2148 = vsel %vm2147, %v2091, 0
        %v2150 = vsel %vm2147, %v2093, 0
        %v2152 = vsel %vm2147, %v2095, 0
        %v2154 = vsel %vm2147, %v2097, 0
        %2156 = vmatprep.subr.bf16.mxu0 0
        %2157 = vmatpush1.bf16.msra.mxu0 0
        %2158 = vmatprep.subr.bf16.mxu0 0
        %2159 = vmatpush1.bf16.msra.mxu0 0
        %2160 = vmatprep.subr.bf16.mxu0 0
        %2161 = vmatpush1.bf16.msra.mxu0 %v2140
        %2162 = vmatprep.subr.bf16.mxu0 0
        %2163 = vmatpush1.bf16.msra.mxu0 %v2139
        %2164 = vmatprep.subr.bf16.mxu0 0
        %2165 = vmatpush1.bf16.msra.mxu0 %v2138
        %2166 = vmatprep.subr.bf16.mxu0 0
        %2167 = vmatpush1.bf16.msra.mxu0 %v2137
        %2168 = vmatprep.subr.bf16.mxu0 0
        %2169 = vmatpush1.bf16.msra.mxu0 %v2136
        %2170 = vmatprep.subr.bf16.mxu0 0
        %2171 = vmatpush1.bf16.msra.mxu0 %v2135
        %2172 = vmatprep.subr.bf16.mxu0 0
        %2173 = vmatpush2.bf16.msra.mxu0 0
        %2174 = vmatprep.subr.bf16.mxu0 0
        %2175 = vmatpush2.bf16.msra.mxu0 0
        %2176 = vmatprep.subr.bf16.mxu0 0
        %2177 = vmatpush2.bf16.msra.mxu0 0
        %2178 = vmatprep.subr.bf16.mxu0 0
        %2179 = vmatpush2.bf16.msra.mxu0 0
        %2180 = vmatprep.subr.bf16.mxu0 0
        %2181 = vmatpush2.bf16.msra.mxu0 0
        %2182 = vmatprep.subr.bf16.mxu0 0
        %2183 = vmatpush2.bf16.msra.mxu0 0
        %2184 = vmatprep.subr.bf16.mxu0 0
        %2185 = vmatpush2.bf16.msra.mxu0 0
        %2186 = vmatprep.subr.bf16.mxu0 0
        %2187 = vmatpush2.bf16.msra.mxu0 0
        %2188 = vmatprep.mubr.bf16.mxu0 0
        %2189 = vmatmul.mubr.bf16.gmra.mxu0 %v2148
        %v2190 = vpop.f32.mrf.mxu0
        %v2191 = vadd.f32 0.0, %v2190
        %v2192 = vpop.f32.mrf.mxu0
        %v2193 = vpop.f32.mrf.mxu0
        %v2194 = vadd.f32 0.0, %v2193
        %v2195 = vpop.f32.mrf.mxu0
        %2196 = vmatprep.mubr.bf16.mxu0 0
        %2197 = vmatmul.mubr.bf16.gmra.mxu0 %v2150
        %v2198 = vpop.f32.mrf.mxu0
        %v2199 = vadd.f32 0.0, %v2198
        %v2200 = vpop.f32.mrf.mxu0
        %v2201 = vpop.f32.mrf.mxu0
        %v2202 = vadd.f32 0.0, %v2201
        %v2203 = vpop.f32.mrf.mxu0
        %2204 = vmatprep.mubr.bf16.mxu0 0
        %2205 = vmatmul.mubr.bf16.gmra.mxu0 %v2152
        %v2206 = vpop.f32.mrf.mxu0
        %v2207 = vadd.f32 0.0, %v2206
        %v2208 = vpop.f32.mrf.mxu0
        %v2209 = vpop.f32.mrf.mxu0
        %v2210 = vadd.f32 0.0, %v2209
        %v2211 = vpop.f32.mrf.mxu0
        %2212 = vmatprep.mubr.bf16.mxu0 0
        %2213 = vmatmul.mubr.bf16.gmra.mxu0 %v2154
        %v2214 = vpop.f32.mrf.mxu0
        %v2215 = vadd.f32 0.0, %v2214
        %v2216 = vpop.f32.mrf.mxu0
        %v2217 = vpop.f32.mrf.mxu0
        %v2218 = vadd.f32 0.0, %v2217
        %v2219 = vpop.f32.mrf.mxu0
        %2220 = vdwg.mxu0
        %v2233 = vunpack.c.l.b16 %v1822
        %v2234 = vunpack.c.l.b16 %v1823
        %v2235 = vunpack.c.l.b16 %v1824
        %v2236 = vunpack.c.l.b16 %v1825
        %v2237 = vunpack.c.l.b16 %v1826
        %v2238 = vunpack.c.l.b16 %v1827
        %v2239 = vunpack.c.l.b16 %v1828
        %v2240 = vunpack.c.l.b16 %v1829
        %v2241 = vunpack.c.l.b16 %v1830
        %v2242 = vunpack.c.l.b16 %v1831
        %v2243 = vunpack.c.l.b16 %v1832
        %v2244 = vunpack.c.l.b16 %v1833
        %v2245 = vpack.c.b16 %v2234, %v2233
        %v2246 = vpack.c.b16 %v2236, %v2235
        %v2247 = vpack.c.b16 %v2238, %v2237
        %v2248 = vpack.c.b16 %v2240, %v2239
        %v2249 = vpack.c.b16 %v2242, %v2241
        %v2250 = vpack.c.b16 %v2244, %v2243
        %v2257 = vsel %vm2147, %v1815, 0
        %v2259 = vsel %vm2147, %v1817, 0
        %v2261 = vsel %vm2147, %v1819, 0
        %v2263 = vsel %vm2147, %v1821, 0
        %2265 = vmatprep.subr.bf16.mxu0 0
        %2266 = vmatpush1.bf16.msra.mxu0 0
        %2267 = vmatprep.subr.bf16.mxu0 0
        %2268 = vmatpush1.bf16.msra.mxu0 0
        %2269 = vmatprep.subr.bf16.mxu0 0
        %2270 = vmatpush1.bf16.msra.mxu0 %v2250
        %2271 = vmatprep.subr.bf16.mxu0 0
        %2272 = vmatpush1.bf16.msra.mxu0 %v2249
        %2273 = vmatprep.subr.bf16.mxu0 0
        %2274 = vmatpush1.bf16.msra.mxu0 %v2248
        %2275 = vmatprep.subr.bf16.mxu0 0
        %2276 = vmatpush1.bf16.msra.mxu0 %v2247
        %2277 = vmatprep.subr.bf16.mxu0 0
        %2278 = vmatpush1.bf16.msra.mxu0 %v2246
        %2279 = vmatprep.subr.bf16.mxu0 0
        %2280 = vmatpush1.bf16.msra.mxu0 %v2245
        %2281 = vmatprep.subr.bf16.mxu0 0
        %2282 = vmatpush2.bf16.msra.mxu0 0
        %2283 = vmatprep.subr.bf16.mxu0 0
        %2284 = vmatpush2.bf16.msra.mxu0 0
        %2285 = vmatprep.subr.bf16.mxu0 0
        %2286 = vmatpush2.bf16.msra.mxu0 0
        %2287 = vmatprep.subr.bf16.mxu0 0
        %2288 = vmatpush2.bf16.msra.mxu0 0
        %2289 = vmatprep.subr.bf16.mxu0 0
        %2290 = vmatpush2.bf16.msra.mxu0 0
        %2291 = vmatprep.subr.bf16.mxu0 0
        %2292 = vmatpush2.bf16.msra.mxu0 0
        %2293 = vmatprep.subr.bf16.mxu0 0
        %2294 = vmatpush2.bf16.msra.mxu0 0
        %2295 = vmatprep.subr.bf16.mxu0 0
        %2296 = vmatpush2.bf16.msra.mxu0 0
        %2297 = vmatprep.mubr.bf16.mxu0 0
        %2298 = vmatmul.mubr.bf16.gmra.mxu0 %v2257
        %v2299 = vpop.f32.mrf.mxu0
        %v2300 = vadd.f32 %v2191, %v2299
        %v2301 = vpop.f32.mrf.mxu0
        %v2302 = vpop.f32.mrf.mxu0
        %v2303 = vadd.f32 %v2194, %v2302
        %v2304 = vpop.f32.mrf.mxu0
        %2305 = vmatprep.mubr.bf16.mxu0 0
        %2306 = vmatmul.mubr.bf16.gmra.mxu0 %v2259
        %v2307 = vpop.f32.mrf.mxu0
        %v2308 = vadd.f32 %v2199, %v2307
        %v2309 = vpop.f32.mrf.mxu0
        %v2310 = vpop.f32.mrf.mxu0
        %v2311 = vadd.f32 %v2202, %v2310
        %v2312 = vpop.f32.mrf.mxu0
        %2313 = vmatprep.mubr.bf16.mxu0 0
        %2314 = vmatmul.mubr.bf16.gmra.mxu0 %v2261
        %v2315 = vpop.f32.mrf.mxu0
        %v2316 = vadd.f32 %v2207, %v2315
        %v2317 = vpop.f32.mrf.mxu0
        %v2318 = vpop.f32.mrf.mxu0
        %v2319 = vadd.f32 %v2210, %v2318
        %v2320 = vpop.f32.mrf.mxu0
        %2321 = vmatprep.mubr.bf16.mxu0 0
        %2322 = vmatmul.mubr.bf16.gmra.mxu0 %v2263
        %v2323 = vpop.f32.mrf.mxu0
        %v2324 = vadd.f32 %v2215, %v2323
        %v2325 = vpop.f32.mrf.mxu0
        %v2326 = vpop.f32.mrf.mxu0
        %v2327 = vadd.f32 %v2218, %v2326
        %v2328 = vpop.f32.mrf.mxu0
        %2329 = vdwg.mxu0
        %s2330 = scalar_lea.vmem [#allocation2], 16
        %v2331 = vld [vmem:[%s2330] sm:$0xf]
        %v2332 = vld [vmem:[%s2330 + $0x8] sm:$0xf]
        %v2333 = vld [vmem:[%s2330 + $0x10] sm:$0xf]
        %v2334 = vld [vmem:[%s2330 + $0x18] sm:$0xf]
        %v2335 = vld [vmem:[%s2330 + $0x20] sm:$0xf]
        %v2336 = vld [vmem:[%s2330 + $0x28] sm:$0xf]
        %v2337 = vld [vmem:[%s2330 + $0x30] sm:$0xf]
        %v2338 = vld [vmem:[%s2330 + $0x38] sm:$0xf]
        %v2339 = vld [vmem:[%s2330 + $0x4] sm:$0x1]
        %v2340 = vld [vmem:[%s2330 + $0xc] sm:$0x1]
        %v2341 = vld [vmem:[%s2330 + $0x14] sm:$0x1]
        %v2342 = vld [vmem:[%s2330 + $0x1c] sm:$0x1]
        %v2343 = vld [vmem:[%s2330 + $0x24] sm:$0x1]
        %v2344 = vld [vmem:[%s2330 + $0x2c] sm:$0x1]
        %v2345 = vld [vmem:[%s2330 + $0x34] sm:$0x1]
        %v2346 = vld [vmem:[%s2330 + $0x3c] sm:$0x1]
        %v2348 = vshrl.u32 %v2331, 16
        %v2350 = vrot.slane %v2348, 4
        %v2351 = vshll.u32 %v2331, 16
        %v2353 = vrot.slane %v2351, 5
        %v2354 = vor.u32 %v2350, %v2353
        %v2355 = vrot.slane %v2354, 4
        %v2357 = vshll.u32 %v2339, 16
        %v2359 = vrot.slane %v2357, 5
        %v2360 = vsel %vm364, %v2355, %v2359
        %v2362 = vshrl.u32 %v2332, 16
        %v2364 = vrot.slane %v2362, 4
        %v2365 = vshll.u32 %v2332, 16
        %v2367 = vrot.slane %v2365, 5
        %v2368 = vor.u32 %v2364, %v2367
        %v2369 = vrot.slane %v2368, 4
        %v2371 = vshll.u32 %v2340, 16
        %v2373 = vrot.slane %v2371, 5
        %v2374 = vsel %vm364, %v2369, %v2373
        %v2376 = vshrl.u32 %v2333, 16
        %v2378 = vrot.slane %v2376, 4
        %v2379 = vshll.u32 %v2333, 16
        %v2381 = vrot.slane %v2379, 5
        %v2382 = vor.u32 %v2378, %v2381
        %v2383 = vrot.slane %v2382, 4
        %v2385 = vshll.u32 %v2341, 16
        %v2387 = vrot.slane %v2385, 5
        %v2388 = vsel %vm364, %v2383, %v2387
        %v2390 = vshrl.u32 %v2334, 16
        %v2392 = vrot.slane %v2390, 4
        %v2393 = vshll.u32 %v2334, 16
        %v2395 = vrot.slane %v2393, 5
        %v2396 = vor.u32 %v2392, %v2395
        %v2397 = vrot.slane %v2396, 4
        %v2399 = vshll.u32 %v2342, 16
        %v2401 = vrot.slane %v2399, 5
        %v2402 = vsel %vm364, %v2397, %v2401
        %v2404 = vshrl.u32 %v2335, 16
        %v2406 = vrot.slane %v2404, 4
        %v2407 = vshll.u32 %v2335, 16
        %v2409 = vrot.slane %v2407, 5
        %v2410 = vor.u32 %v2406, %v2409
        %v2411 = vrot.slane %v2410, 4
        %v2413 = vshll.u32 %v2343, 16
        %v2415 = vrot.slane %v2413, 5
        %v2416 = vsel %vm364, %v2411, %v2415
        %v2418 = vshrl.u32 %v2336, 16
        %v2420 = vrot.slane %v2418, 4
        %v2421 = vshll.u32 %v2336, 16
        %v2423 = vrot.slane %v2421, 5
        %v2424 = vor.u32 %v2420, %v2423
        %v2425 = vrot.slane %v2424, 4
        %v2427 = vshll.u32 %v2344, 16
        %v2429 = vrot.slane %v2427, 5
        %v2430 = vsel %vm364, %v2425, %v2429
        %v2432 = vshrl.u32 %v2337, 16
        %v2434 = vrot.slane %v2432, 4
        %v2435 = vshll.u32 %v2337, 16
        %v2437 = vrot.slane %v2435, 5
        %v2438 = vor.u32 %v2434, %v2437
        %v2439 = vrot.slane %v2438, 4
        %v2441 = vshll.u32 %v2345, 16
        %v2443 = vrot.slane %v2441, 5
        %v2444 = vsel %vm364, %v2439, %v2443
        %v2446 = vshrl.u32 %v2338, 16
        %v2448 = vrot.slane %v2446, 4
        %v2449 = vshll.u32 %v2338, 16
        %v2451 = vrot.slane %v2449, 5
        %v2452 = vor.u32 %v2448, %v2451
        %v2453 = vrot.slane %v2452, 4
        %v2455 = vshll.u32 %v2346, 16
        %v2457 = vrot.slane %v2455, 5
        %v2458 = vsel %vm364, %v2453, %v2457
        %v2459 = vld [vmem:[%s2330] sm:$0xe]
        %v2460 = vld [vmem:[%s2330 + $0x8] sm:$0xe]
        %v2461 = vld [vmem:[%s2330 + $0x10] sm:$0xe]
        %v2462 = vld [vmem:[%s2330 + $0x18] sm:$0xe]
        %v2463 = vld [vmem:[%s2330 + $0x20] sm:$0xe]
        %v2464 = vld [vmem:[%s2330 + $0x28] sm:$0xe]
        %v2465 = vld [vmem:[%s2330 + $0x30] sm:$0xe]
        %v2466 = vld [vmem:[%s2330 + $0x38] sm:$0xe]
        %v2483 = vrot.slane %v2459, 5
        %v2484 = vrot.slane %v2483, 4
        %v2485 = vrot.slane %v2339, 5
        %v2486 = vsel %vm1708, %v2484, %v2485
        %v2487 = vrot.slane %v2460, 5
        %v2488 = vrot.slane %v2487, 4
        %v2489 = vrot.slane %v2340, 5
        %v2490 = vsel %vm1708, %v2488, %v2489
        %v2491 = vrot.slane %v2461, 5
        %v2492 = vrot.slane %v2491, 4
        %v2493 = vrot.slane %v2341, 5
        %v2494 = vsel %vm1708, %v2492, %v2493
        %v2495 = vrot.slane %v2462, 5
        %v2496 = vrot.slane %v2495, 4
        %v2497 = vrot.slane %v2342, 5
        %v2498 = vsel %vm1708, %v2496, %v2497
        %v2499 = vrot.slane %v2463, 5
        %v2500 = vrot.slane %v2499, 4
        %v2501 = vrot.slane %v2343, 5
        %v2502 = vsel %vm1708, %v2500, %v2501
        %v2503 = vrot.slane %v2464, 5
        %v2504 = vrot.slane %v2503, 4
        %v2505 = vrot.slane %v2344, 5
        %v2506 = vsel %vm1708, %v2504, %v2505
        %v2507 = vrot.slane %v2465, 5
        %v2508 = vrot.slane %v2507, 4
        %v2509 = vrot.slane %v2345, 5
        %v2510 = vsel %vm1708, %v2508, %v2509
        %v2511 = vrot.slane %v2466, 5
        %v2512 = vrot.slane %v2511, 4
        %v2513 = vrot.slane %v2346, 5
        %v2514 = vsel %vm1708, %v2512, %v2513
        %v2523 = vunpack.c.l.b16 %v2331
        %v2524 = vunpack.c.l.b16 %v2332
        %v2525 = vunpack.c.l.b16 %v2333
        %v2526 = vunpack.c.l.b16 %v2334
        %v2527 = vunpack.c.l.b16 %v2335
        %v2528 = vunpack.c.l.b16 %v2336
        %v2529 = vunpack.c.l.b16 %v2337
        %v2530 = vunpack.c.l.b16 %v2338
        %v2531 = vpack.c.b16 %v2524, %v2523
        %v2532 = vpack.c.b16 %v2526, %v2525
        %v2533 = vpack.c.b16 %v2528, %v2527
        %v2534 = vpack.c.b16 %v2530, %v2529
        %v2535 = vunpack.c.l.b16 %v2360
        %v2536 = vunpack.c.l.b16 %v2374
        %v2537 = vunpack.c.l.b16 %v2388
        %v2538 = vunpack.c.l.b16 %v2402
        %v2539 = vunpack.c.l.b16 %v2416
        %v2540 = vunpack.c.l.b16 %v2430
        %v2541 = vunpack.c.l.b16 %v2444
        %v2542 = vunpack.c.l.b16 %v2458
        %v2543 = vpack.c.b16 %v2536, %v2535
        %v2544 = vpack.c.b16 %v2538, %v2537
        %v2545 = vpack.c.b16 %v2540, %v2539
        %v2546 = vpack.c.b16 %v2542, %v2541
        %2547 = vrot.lane.b32.xlu0 %v2543, 32
        %v2548 = vpop.permute.xlu0 %2547
        %2549 = vrot.lane.b32.xlu0 %v2544, 32
        %v2550 = vpop.permute.xlu0 %2549
        %2551 = vrot.lane.b32.xlu0 %v2545, 32
        %v2552 = vpop.permute.xlu0 %2551
        %2553 = vrot.lane.b32.xlu0 %v2546, 32
        %v2554 = vpop.permute.xlu0 %2553
        %v2555 = vunpack.c.l.b16 %v2486
        %v2556 = vunpack.c.l.b16 %v2490
        %v2557 = vunpack.c.l.b16 %v2494
        %v2558 = vunpack.c.l.b16 %v2498
        %v2559 = vunpack.c.l.b16 %v2502
        %v2560 = vunpack.c.l.b16 %v2506
        %v2561 = vunpack.c.l.b16 %v2510
        %v2562 = vunpack.c.l.b16 %v2514
        %v2563 = vpack.c.b16 %v2556, %v2555
        %v2564 = vpack.c.b16 %v2558, %v2557
        %v2565 = vpack.c.b16 %v2560, %v2559
        %v2566 = vpack.c.b16 %v2562, %v2561
        %2567 = vrot.lane.b32.xlu0 %v2563, 64
        %v2568 = vpop.permute.xlu0 %2567
        %2569 = vrot.lane.b32.xlu0 %v2564, 64
        %v2570 = vpop.permute.xlu0 %2569
        %2571 = vrot.lane.b32.xlu0 %v2565, 64
        %v2572 = vpop.permute.xlu0 %2571
        %2573 = vrot.lane.b32.xlu0 %v2566, 64
        %v2574 = vpop.permute.xlu0 %2573
        %v2577 = vsel %vm558, %v2531, %v2548
        %v2580 = vsel %vm558, %v2532, %v2550
        %v2583 = vsel %vm558, %v2533, %v2552
        %v2586 = vsel %vm558, %v2534, %v2554
        %v2588 = vsel %vm1813, %v2577, %v2568
        %v2590 = vsel %vm1813, %v2580, %v2570
        %v2592 = vsel %vm1813, %v2583, %v2572
        %v2594 = vsel %vm1813, %v2586, %v2574
        %s2595 = scalar_lea.vmem %s5, 96
        %v2596 = vld [vmem:[%s2595] sm:$0xf]
        %v2597 = vld [vmem:[%s2595 + $0x4] sm:$0xf]
        %v2598 = vld [vmem:[%s2595 + $0x8] sm:$0xf]
        %v2599 = vld [vmem:[%s2595 + $0xc] sm:$0xf]
        %v2600 = vld [vmem:[%s2595 + $0x10] sm:$0xf]
        %v2601 = vld [vmem:[%s2595 + $0x14] sm:$0xf]
        %v2602 = vld [vmem:[%s2595 + $0x18] sm:$0xf]
        %v2603 = vld [vmem:[%s2595 + $0x1c] sm:$0xf]
        %v2604 = vld [vmem:[%s2595 + $0x20] sm:$0xf]
        %v2605 = vld [vmem:[%s2595 + $0x24] sm:$0xf]
        %v2606 = vld [vmem:[%s2595 + $0x28] sm:$0xf]
        %v2607 = vld [vmem:[%s2595 + $0x2c] sm:$0xf]
        %v2620 = vunpack.c.l.b16 %v2596
        %v2621 = vunpack.c.l.b16 %v2597
        %v2622 = vunpack.c.l.b16 %v2598
        %v2623 = vunpack.c.l.b16 %v2599
        %v2624 = vunpack.c.l.b16 %v2600
        %v2625 = vunpack.c.l.b16 %v2601
        %v2626 = vunpack.c.l.b16 %v2602
        %v2627 = vunpack.c.l.b16 %v2603
        %v2628 = vunpack.c.l.b16 %v2604
        %v2629 = vunpack.c.l.b16 %v2605
        %v2630 = vunpack.c.l.b16 %v2606
        %v2631 = vunpack.c.l.b16 %v2607
        %v2632 = vpack.c.b16 %v2621, %v2620
        %v2633 = vpack.c.b16 %v2623, %v2622
        %v2634 = vpack.c.b16 %v2625, %v2624
        %v2635 = vpack.c.b16 %v2627, %v2626
        %v2636 = vpack.c.b16 %v2629, %v2628
        %v2637 = vpack.c.b16 %v2631, %v2630
        %v2644 = vsel %vm2147, %v2588, 0
        %v2646 = vsel %vm2147, %v2590, 0
        %v2648 = vsel %vm2147, %v2592, 0
        %v2650 = vsel %vm2147, %v2594, 0
        %2652 = vmatprep.subr.bf16.mxu0 0
        %2653 = vmatpush1.bf16.msra.mxu0 0
        %2654 = vmatprep.subr.bf16.mxu0 0
        %2655 = vmatpush1.bf16.msra.mxu0 0
        %2656 = vmatprep.subr.bf16.mxu0 0
        %2657 = vmatpush1.bf16.msra.mxu0 %v2637
        %2658 = vmatprep.subr.bf16.mxu0 0
        %2659 = vmatpush1.bf16.msra.mxu0 %v2636
        %2660 = vmatprep.subr.bf16.mxu0 0
        %2661 = vmatpush1.bf16.msra.mxu0 %v2635
        %2662 = vmatprep.subr.bf16.mxu0 0
        %2663 = vmatpush1.bf16.msra.mxu0 %v2634
        %2664 = vmatprep.subr.bf16.mxu0 0
        %2665 = vmatpush1.bf16.msra.mxu0 %v2633
        %2666 = vmatprep.subr.bf16.mxu0 0
        %2667 = vmatpush1.bf16.msra.mxu0 %v2632
        %2668 = vmatprep.subr.bf16.mxu0 0
        %2669 = vmatpush2.bf16.msra.mxu0 0
        %2670 = vmatprep.subr.bf16.mxu0 0
        %2671 = vmatpush2.bf16.msra.mxu0 0
        %2672 = vmatprep.subr.bf16.mxu0 0
        %2673 = vmatpush2.bf16.msra.mxu0 0
        %2674 = vmatprep.subr.bf16.mxu0 0
        %2675 = vmatpush2.bf16.msra.mxu0 0
        %2676 = vmatprep.subr.bf16.mxu0 0
        %2677 = vmatpush2.bf16.msra.mxu0 0
        %2678 = vmatprep.subr.bf16.mxu0 0
        %2679 = vmatpush2.bf16.msra.mxu0 0
        %2680 = vmatprep.subr.bf16.mxu0 0
        %2681 = vmatpush2.bf16.msra.mxu0 0
        %2682 = vmatprep.subr.bf16.mxu0 0
        %2683 = vmatpush2.bf16.msra.mxu0 0
        %2684 = vmatprep.mubr.bf16.mxu0 0
        %2685 = vmatmul.mubr.bf16.gmra.mxu0 %v2644
        %v2686 = vpop.f32.mrf.mxu0
        %v2687 = vadd.f32 0.0, %v2686
        %v2688 = vpop.f32.mrf.mxu0
        %v2689 = vpop.f32.mrf.mxu0
        %v2690 = vadd.f32 0.0, %v2689
        %v2691 = vpop.f32.mrf.mxu0
        %2692 = vmatprep.mubr.bf16.mxu0 0
        %2693 = vmatmul.mubr.bf16.gmra.mxu0 %v2646
        %v2694 = vpop.f32.mrf.mxu0
        %v2695 = vadd.f32 0.0, %v2694
        %v2696 = vpop.f32.mrf.mxu0
        %v2697 = vpop.f32.mrf.mxu0
        %v2698 = vadd.f32 0.0, %v2697
        %v2699 = vpop.f32.mrf.mxu0
        %2700 = vmatprep.mubr.bf16.mxu0 0
        %2701 = vmatmul.mubr.bf16.gmra.mxu0 %v2648
        %v2702 = vpop.f32.mrf.mxu0
        %v2703 = vadd.f32 0.0, %v2702
        %v2704 = vpop.f32.mrf.mxu0
        %v2705 = vpop.f32.mrf.mxu0
        %v2706 = vadd.f32 0.0, %v2705
        %v2707 = vpop.f32.mrf.mxu0
        %2708 = vmatprep.mubr.bf16.mxu0 0
        %2709 = vmatmul.mubr.bf16.gmra.mxu0 %v2650
        %v2710 = vpop.f32.mrf.mxu0
        %v2711 = vadd.f32 0.0, %v2710
        %v2712 = vpop.f32.mrf.mxu0
        %v2713 = vpop.f32.mrf.mxu0
        %v2714 = vadd.f32 0.0, %v2713
        %v2715 = vpop.f32.mrf.mxu0
        %2716 = vdwg.mxu0
        %v2717 = vadd.f32 %v2300, %v2687
        %v2718 = vadd.f32 %v2303, %v2690
        %v2719 = vadd.f32 %v2308, %v2695
        %v2720 = vadd.f32 %v2311, %v2698
        %v2721 = vadd.f32 %v2316, %v2703
        %v2722 = vadd.f32 %v2319, %v2706
        %v2723 = vadd.f32 %v2324, %v2711
        %v2724 = vadd.f32 %v2327, %v2714
        %v2725 = vld [vmem:[%s336] sm:$0xf]
        %v2726 = vld [vmem:[%s336 + $0x8] sm:$0xf]
        %v2727 = vld [vmem:[%s336 + $0x10] sm:$0xf]
        %v2728 = vld [vmem:[%s336 + $0x18] sm:$0xf]
        %v2729 = vld [vmem:[%s336 + $0x20] sm:$0xf]
        %v2730 = vld [vmem:[%s336 + $0x28] sm:$0xf]
        %v2731 = vld [vmem:[%s336 + $0x30] sm:$0xf]
        %v2732 = vld [vmem:[%s336 + $0x38] sm:$0xf]
        %v2733 = vld [vmem:[%s6] sm:$0xf]
        %v2734 = vld [vmem:[%s6 + $0x4] sm:$0xf]
        %v2743 = vunpack.c.l.b16 %v2725
        %v2744 = vunpack.c.l.b16 %v2726
        %v2745 = vunpack.c.l.b16 %v2727
        %v2746 = vunpack.c.l.b16 %v2728
        %v2747 = vunpack.c.l.b16 %v2729
        %v2748 = vunpack.c.l.b16 %v2730
        %v2749 = vunpack.c.l.b16 %v2731
        %v2750 = vunpack.c.l.b16 %v2732
        %v2751 = vpack.c.b16 %v2744, %v2743
        %v2752 = vpack.c.b16 %v2746, %v2745
        %v2753 = vpack.c.b16 %v2748, %v2747
        %v2754 = vpack.c.b16 %v2750, %v2749
        %v2757 = vunpack.c.l.b16 %v2733
        %v2758 = vunpack.c.l.b16 %v2734
        %v2759 = vpack.c.b16 %v2758, %v2757
        %v2762 = vsel %vm545, %v2751, 0
        %v2765 = vsel %vm545, %v2752, 0
        %v2768 = vsel %vm545, %v2753, 0
        %v2771 = vsel %vm545, %v2754, 0
        %2773 = vmatprep.subr.bf16.mxu0 0
        %2774 = vmatpush1.bf16.msra.mxu0 0
        %2775 = vmatprep.subr.bf16.mxu0 0
        %2776 = vmatpush1.bf16.msra.mxu0 0
        %2777 = vmatprep.subr.bf16.mxu0 0
        %2778 = vmatpush1.bf16.msra.mxu0 0
        %2779 = vmatprep.subr.bf16.mxu0 0
        %2780 = vmatpush1.bf16.msra.mxu0 0
        %2781 = vmatprep.subr.bf16.mxu0 0
        %2782 = vmatpush1.bf16.msra.mxu0 0
        %2783 = vmatprep.subr.bf16.mxu0 0
        %2784 = vmatpush1.bf16.msra.mxu0 0
        %2785 = vmatprep.subr.bf16.mxu0 0
        %2786 = vmatpush1.bf16.msra.mxu0 0
        %2787 = vmatprep.subr.bf16.mxu0 0
        %2788 = vmatpush1.bf16.msra.mxu0 %v2759
        %2789 = vmatprep.subr.bf16.mxu0 0
        %2790 = vmatpush2.bf16.msra.mxu0 0
        %2791 = vmatprep.subr.bf16.mxu0 0
        %2792 = vmatpush2.bf16.msra.mxu0 0
        %2793 = vmatprep.subr.bf16.mxu0 0
        %2794 = vmatpush2.bf16.msra.mxu0 0
        %2795 = vmatprep.subr.bf16.mxu0 0
        %2796 = vmatpush2.bf16.msra.mxu0 0
        %2797 = vmatprep.subr.bf16.mxu0 0
        %2798 = vmatpush2.bf16.msra.mxu0 0
        %2799 = vmatprep.subr.bf16.mxu0 0
        %2800 = vmatpush2.bf16.msra.mxu0 0
        %2801 = vmatprep.subr.bf16.mxu0 0
        %2802 = vmatpush2.bf16.msra.mxu0 0
        %2803 = vmatprep.subr.bf16.mxu0 0
        %2804 = vmatpush2.bf16.msra.mxu0 0
        %2805 = vmatprep.mubr.bf16.mxu0 0
        %2806 = vmatmul.mubr.bf16.gmra.mxu0 %v2762
        %v2807 = vpop.f32.mrf.mxu0
        %v2808 = vadd.f32 0.0, %v2807
        %v2809 = vpop.f32.mrf.mxu0
        %v2810 = vpop.f32.mrf.mxu0
        %v2811 = vadd.f32 0.0, %v2810
        %v2812 = vpop.f32.mrf.mxu0
        %2813 = vmatprep.mubr.bf16.mxu0 0
        %2814 = vmatmul.mubr.bf16.gmra.mxu0 %v2765
        %v2815 = vpop.f32.mrf.mxu0
        %v2816 = vadd.f32 0.0, %v2815
        %v2817 = vpop.f32.mrf.mxu0
        %v2818 = vpop.f32.mrf.mxu0
        %v2819 = vadd.f32 0.0, %v2818
        %v2820 = vpop.f32.mrf.mxu0
        %2821 = vmatprep.mubr.bf16.mxu0 0
        %2822 = vmatmul.mubr.bf16.gmra.mxu0 %v2768
        %v2823 = vpop.f32.mrf.mxu0
        %v2824 = vadd.f32 0.0, %v2823
        %v2825 = vpop.f32.mrf.mxu0
        %v2826 = vpop.f32.mrf.mxu0
        %v2827 = vadd.f32 0.0, %v2826
        %v2828 = vpop.f32.mrf.mxu0
        %2829 = vmatprep.mubr.bf16.mxu0 0
        %2830 = vmatmul.mubr.bf16.gmra.mxu0 %v2771
        %v2831 = vpop.f32.mrf.mxu0
        %v2832 = vadd.f32 0.0, %v2831
        %v2833 = vpop.f32.mrf.mxu0
        %v2834 = vpop.f32.mrf.mxu0
        %v2835 = vadd.f32 0.0, %v2834
        %v2836 = vpop.f32.mrf.mxu0
        %2837 = vdwg.mxu0
        %v2838 = vadd.f32 %v2717, %v2808
        %v2839 = vadd.f32 %v2718, %v2811
        %v2840 = vadd.f32 %v2719, %v2816
        %v2841 = vadd.f32 %v2720, %v2819
        %v2842 = vadd.f32 %v2721, %v2824
        %v2843 = vadd.f32 %v2722, %v2827
        %v2844 = vadd.f32 %v2723, %v2832
        %v2845 = vadd.f32 %v2724, %v2835
        %v2846 = vmax.f32 %v2838, 0.0
        %v2847 = vmax.f32 %v2839, 0.0
        %v2848 = vmax.f32 %v2840, 0.0
        %v2849 = vmax.f32 %v2841, 0.0
        %v2850 = vmax.f32 %v2842, 0.0
        %v2851 = vmax.f32 %v2843, 0.0
        %v2852 = vmax.f32 %v2844, 0.0
        %v2853 = vmax.f32 %v2845, 0.0
        %2854 = vst.msk [vmem:[%s316] sm:$0xff] %vm558, %v2846
        %2855 = vst.msk [vmem:[%s316 + $0x8] sm:$0xff] %vm558, %v2847
        %2856 = vst.msk [vmem:[%s316 + $0x10] sm:$0xff] %vm558, %v2848
        %2857 = vst.msk [vmem:[%s316 + $0x18] sm:$0xff] %vm558, %v2849
        %2858 = vst.msk [vmem:[%s316 + $0x20] sm:$0xff] %vm558, %v2850
        %2859 = vst.msk [vmem:[%s316 + $0x28] sm:$0xff] %vm558, %v2851
        %2860 = vst.msk [vmem:[%s316 + $0x30] sm:$0xff] %vm558, %v2852
        %2861 = vst.msk [vmem:[%s316 + $0x38] sm:$0xff] %vm558, %v2853
        %s2862 = sand.u32 %s196, 1
        %s2863 = scalar_lea.sflag [#allocation4], %s2862
        %s2864 = sand.u32 %s196, 1
        %s2865 = smul.addr %s2864, 64
        %s2866 = scalar_lea.vmem [#allocation3], %s2865
        // Predicated region
        $region49: #{basic_block_forward.1} parent=47 // pred_check
          %p2867 = pneg %p206
        $region50: #{basic_block_forward.1} parent=47 // pred_check_branch
          %2869 = sbr.rel (%p2867) target = $region52
        $region51: #{basic_block_forward.1} parent=47 // pred_region
          %s2871 = ssub.s32 1024, 1024
          %2872 = vsyncadd %s2863, %s2871
          %s2873 = smul.addr %s21, 8
          %s2874 = smul.addr %s2873, 128
          %s2875 = scalar_lea.hbm %s7, %s2874
          %s2876 = sshll.u32 %s2866, 4
          %s2877 = int_to_ptr.vmem [resolvable:$true] %s2876
          %2882 = dma.vmem_to_hbm [thread:$0]  %s2877, 1024, %s2875, %s2863, 128, 128, 8
        $region52: #{basic_block_forward.1} parent=47 // pred_fallthru
          _
      $region48: #{basic_block_forward.1} parent=5 // pred_fallthru
        _
      %p2883 = scmp.le.s32.totalorder 2, %s16
      // Predicated region
      $region53: #{basic_block_forward.1} parent=5 // pred_check
        %p2884 = pneg %p2883
      $region54: #{basic_block_forward.1} parent=5 // pred_check_branch
        %2886 = sbr.rel (%p2884) target = $region56
      $region55: #{basic_block_forward.1} parent=5 // pred_region
        %s2887 = ssub.s32 %s16, 2
        // Predicated region
        $region57: #{basic_block_forward.1} parent=55 // pred_check
          %p2888 = pneg %p212
        $region58: #{basic_block_forward.1} parent=55 // pred_check_branch
          %2890 = sbr.rel (%p2888) target = $region60
        $region59: #{basic_block_forward.1} parent=55 // pred_region
          %s2891 = sand.u32 %s197, 1
          %s2892 = scalar_lea.sflag [#allocation4], %s2891
          %s2893 = sand.u32 %s197, 1
          %s2894 = smul.addr %s2893, 64
          %s2895 = scalar_lea.vmem [#allocation3], %s2894
          %2896 = dma.done %s2892, 1024
        $region60: #{basic_block_forward.1} parent=55 // pred_fallthru
          _
      $region56: #{basic_block_forward.1} parent=5 // pred_fallthru
        _
    $region6: #{basic_block_forward.1} parent=1 // loop_footer
      %s20 = sadd.s32 1, %s16
    $region7: #{basic_block_forward.1} parent=1 // loop_footer_branch
      %15 = sbr.rel target = $region3
    $region8: #{basic_block_forward.1} parent=1 // loop_exit
      _
    %2897 = vsyncpa [#allocation4], 1
    %s2898 = scalar_lea.sflag [#allocation4], 1
    %2899 = vsyncpa %s2898, 1

</llo_original>
